<compile_context>
chip_gen: v7x
topology: tpu7x:2x2x1
jax: 0.10.0
libtpu: 0.0.40
codegen_flags: <defaults>
</compile_context>

<pallas_src>
import functools

import jax
import jax.numpy as jnp
from jax.experimental import pallas as pl
from jax.experimental.pallas import tpu as pltpu

HIDDEN = 256
_LANE = 128


def _round_up(x, m):
    return ((x + m - 1) // m) * m


# ---------------------------------------------------------------------------
# Grid-invariant (weight) BlockSpecs: single-buffer them when the installed
# JAX supports pipeline_mode (their index_map is constant, double-buffering
# only doubles their VMEM footprint). Fall back cleanly otherwise.
# ---------------------------------------------------------------------------
def _rep_spec_single(shape):
    return pl.BlockSpec(shape, lambda i: (0, 0), pipeline_mode=pl.Buffered(1))


def _rep_spec_double(shape):
    return pl.BlockSpec(shape, lambda i: (0, 0))


try:
    _rep_spec_single((8, 128))          # probe constructor support only
    _REP_SPEC = _rep_spec_single
    _REP_BUFS = 1
except Exception:                        # older JAX without pipeline_mode
    _REP_SPEC = _rep_spec_double
    _REP_BUFS = 2


def _default_tile_b():
    """Per-generation default batch tile (review: 512 on v6e/v7x, 256 on v5e)."""
    try:
        kind = jax.devices()[0].device_kind.lower()
    except Exception:
        return 512
    if ("v5 lite" in kind) or ("v5e" in kind) or ("v5lite" in kind):
        return 256
    return 512


def _choose_tiling(batch, tile_b_req):
    """Pick (tile_b, b_pad, num_tiles).

    Guarantees: tile_b multiple of 8, tile_b <= tile_b_req, >=2 grid steps
    whenever the (8-padded) batch allows it (keeps both v7x TensorCores busy),
    and batch-padding waste < 8 rows per tile (no tile_b-sized dead work).
    """
    b8 = _round_up(batch, 8)
    if b8 <= 8:
        return 8, 8, 1
    num_tiles = max(2, pl.cdiv(b8, tile_b_req))
    tile_b = _round_up(pl.cdiv(b8, num_tiles), 8)
    return tile_b, tile_b * num_tiles, num_tiles


# ---------------------------------------------------------------------------
# Kernel
# ---------------------------------------------------------------------------
def _mlp_kernel(x_ref,
                w1, b1, w2, b2, w3, b3, w4, b4,
                w5, b5, w6, b6, w7, b7, w8, b8,
                o_ref, *, compute_dtype, use_vpu_first_layer):
    """Fused 8-layer MLP: 7x (Linear + ReLU) followed by a final Linear.

    Matmul inputs are compute_dtype (bf16) so the MXU runs at its native rate;
    accumulation, bias-add and ReLU stay in f32.
    """

    def linear(h, w, b):
        # f32 accumulation on the MXU; bias is a (1, out) f32 row that
        # broadcasts implicitly.
        return jnp.dot(h, w[...], preferred_element_type=jnp.float32) + b[...]

    def linear_relu(h, w, b):
        return jnp.maximum(linear(h, w, b), 0.0).astype(compute_dtype)

    if use_vpu_first_layer:
        # Tiny, lane-unaligned feature dim: do layer 1 as a balanced tree of
        # lane-broadcast FMAs on the VPU (no feature-dim padding, and only
        # O(log C) serial depth instead of a length-C chain).
        n_feat = x_ref.shape[-1]
        x_f32 = x_ref[...].astype(jnp.float32)      # x is already bf16 (host)
        w1_f32 = w1[...].astype(jnp.float32)
        terms = [x_f32[:, c:c + 1] * w1_f32[c:c + 1, :] for c in range(n_feat)]
        while len(terms) > 1:                        # balanced partial sums
            nxt = [a + b for a, b in zip(terms[0::2], terms[1::2])]
            if len(terms) % 2:
                nxt.append(terms[-1])
            terms = nxt
        h = jnp.maximum(terms[0] + b1[...], 0.0).astype(compute_dtype)
    else:
        h = linear_relu(x_ref[...], w1, b1)

    h = linear_relu(h, w2, b2)
    h = linear_relu(h, w3, b3)
    h = linear_relu(h, w4, b4)
    h = linear_relu(h, w5, b5)
    h = linear_relu(h, w6, b6)
    h = linear_relu(h, w7, b7)
    # last layer: no ReLU
    o_ref[...] = linear(h, w8, b8).astype(o_ref.dtype)


# ---------------------------------------------------------------------------
# Host wrapper
# ---------------------------------------------------------------------------
def mlp_forward(x, params, num_quantiles, *, tile_b=None,
                compute_dtype=jnp.bfloat16):
    """x: (B, C) float32. params: list of 8 (W, b) pairs with W (in, out)."""
    B, C = x.shape
    if tile_b is None:
        tile_b = _default_tile_b()
    tile_b = max(8, int(tile_b))
    tile_b, b_pad, _ = _choose_tiling(B, tile_b)

    # Keep the output lane-dense (>=128): unmasked stores; slice on the host.
    q_pad = _round_up(max(num_quantiles, 1), _LANE)

    (w1, b1), (w2, b2), (w3, b3), (w4, b4), \
        (w5, b5), (w6, b6), (w7, b7), (w8, b8) = params

    # First layer: tiny unaligned C -> VPU tree; otherwise MXU (pad C to 128
    # once on the host when it is lane-unaligned).
    use_vpu_first_layer = (C % _LANE != 0) and (C <= 16)
    if use_vpu_first_layer or (C % _LANE == 0):
        c_in = C
        w1_in = w1.astype(compute_dtype)
    else:
        c_in = _round_up(C, _LANE)
        w1_in = (jnp.zeros((c_in, HIDDEN), jnp.float32)
                 .at[:C, :].set(w1).astype(compute_dtype))

    # Input: cast to compute_dtype on the host (halves the per-step input DMA)
    # and zero-pad batch / feature dims only if needed.
    if b_pad == B and c_in == C:
        x_p = x.astype(compute_dtype)
    else:
        x_p = (jnp.zeros((b_pad, c_in), compute_dtype)
               .at[:B, :C].set(x.astype(compute_dtype)))

    # Last layer: zero-pad the output columns (a no-op for the valid region).
    w8_p = (jnp.zeros((HIDDEN, q_pad), jnp.float32)
            .at[:, :num_quantiles].set(w8).astype(compute_dtype))
    b8_p = jnp.zeros((1, q_pad), jnp.float32).at[:, :num_quantiles].set(
        b8.reshape(1, -1))

    def wcast(w):
        return w.astype(compute_dtype)

    def row(b):  # biases as (1, out) f32 rows -> clean 2-D VMEM tiles
        return b.reshape(1, -1).astype(jnp.float32)

    weight_args = [
        w1_in, row(b1), wcast(w2), row(b2), wcast(w3), row(b3),
        wcast(w4), row(b4), wcast(w5), row(b5), wcast(w6), row(b6),
        wcast(w7), row(b7), w8_p, b8_p,
    ]

    in_specs = [pl.BlockSpec((tile_b, c_in), lambda i: (i, 0))]
    in_specs += [_REP_SPEC(a.shape) for a in weight_args]

    # VMEM budget: weights (x _REP_BUFS), double-buffered x/out tiles, plus
    # headroom for the live f32 activations / MXU accumulator temporaries.
    w_isz = jnp.dtype(compute_dtype).itemsize
    vmem_est = int(
        _REP_BUFS * w_isz * (c_in * HIDDEN + 6 * HIDDEN * HIDDEN
                             + HIDDEN * q_pad)
        + _REP_BUFS * 4 * (7 * HIDDEN + q_pad)
        + 2 * w_isz * tile_b * c_in
        + 2 * 4 * tile_b * q_pad
        + 8 * 4 * tile_b * HIDDEN)
    compiler_kwargs = dict(dimension_semantics=("parallel",))
    if vmem_est > 8 * 1024 * 1024:
        # Conservative trigger (v5e scoped default is 16 MiB); cap well under
        # v7x's 64 MiB physical VMEM per TensorCore.
        compiler_kwargs["vmem_limit_bytes"] = int(
            min(2 * vmem_est, 48 * 1024 * 1024))

    kernel = functools.partial(_mlp_kernel, compute_dtype=compute_dtype,
                               use_vpu_first_layer=use_vpu_first_layer)

    out = pl.pallas_call(
        kernel,
        out_shape=jax.ShapeDtypeStruct((b_pad, q_pad), jnp.float32),
        grid_spec=pltpu.PrefetchScalarGridSpec(
            num_scalar_prefetch=0,
            grid=(b_pad // tile_b,),
            in_specs=in_specs,
            out_specs=pl.BlockSpec((tile_b, q_pad), lambda i: (i, 0)),
        ),
        compiler_params=pltpu.CompilerParams(**compiler_kwargs),
    )(x_p, *weight_args)

    return out[:B, :num_quantiles]


# ---------------------------------------------------------------------------
# Parameter init + pure-JAX reference
# ---------------------------------------------------------------------------
def init_params(key, num_channels, num_quantiles):
    """Deterministic PyTorch-style init: U(-1/sqrt(fan_in), 1/sqrt(fan_in))."""
    dims = [num_channels] + [HIDDEN] * 7 + [num_quantiles]
    params = []
    for i in range(8):
        fan_in, fan_out = dims[i], dims[i + 1]
        key, kw, kb = jax.random.split(key, 3)
        bound = 1.0 / jnp.sqrt(jnp.float32(fan_in))
        w = jax.random.uniform(kw, (fan_in, fan_out), jnp.float32,
                               minval=-bound, maxval=bound)
        b = jax.random.uniform(kb, (fan_out,), jnp.float32,
                               minval=-bound, maxval=bound)
        params.append((w, b))
    return params


def reference_forward(x, params, compute_dtype=None):
    """Pure-JAX reference. If compute_dtype is set, matmul inputs are cast to
    it (with f32 accumulation) to mirror the kernel's mixed-precision path."""
    h = x.astype(jnp.float32)
    for i, (w, b) in enumerate(params):
        if compute_dtype is not None:
            hi, wi = h.astype(compute_dtype), w.astype(compute_dtype)
        else:
            hi, wi = h, w
        h = jnp.dot(hi, wi, preferred_element_type=jnp.float32) + b
        if i < 7:
            h = jnp.maximum(h, 0.0)
    return h


if __name__ == "__main__":
    root_key = jax.random.PRNGKey(0)
    case_keys = jax.random.split(root_key, 2)

    def run_case(case_key, batch, num_channels, num_quantiles, tile_b=None):
        kx, kp = jax.random.split(case_key)
        x = jax.random.normal(kx, (batch, num_channels), jnp.float32)
        params = init_params(kp, num_channels, num_quantiles)
        fwd = jax.jit(functools.partial(
            mlp_forward, num_quantiles=num_quantiles, tile_b=tile_b))
        y = fwd(x, params)
        jax.block_until_ready(y)
        assert y.shape == (batch, num_quantiles)
        # Precision-matched reference (bf16 matmul inputs, f32 accumulation).
        y_ref = reference_forward(x, params, compute_dtype=jnp.bfloat16)
        err = float(jnp.max(jnp.abs(y - y_ref)))
        assert jnp.allclose(y, y_ref, atol=2e-3, rtol=2e-3), err
        return y

    # Case 1: module-typical tiny input (B=2, C=4) -> VPU first layer, 1 tile.
    y1 = run_case(case_keys[0], batch=2, num_channels=4, num_quantiles=8)
    # Case 2: lane-unaligned larger C and B>8 -> padded-C MXU first layer and
    # a >=2-step grid (exercises the megacore / batch-padding paths).
    y2 = run_case(case_keys[1], batch=20, num_channels=192, num_quantiles=8,
                  tile_b=256)
    # Sanity check case 1 against the pure-f32 reference (looser: bf16 inputs).
    kx, kp = jax.random.split(case_keys[0])
    x1 = jax.random.normal(kx, (2, 4), jnp.float32)
    params1 = init_params(kp, 4, 8)
    y_f32 = reference_forward(x1, params1)
    assert jnp.allclose(y1, y_f32, atol=1e-2, rtol=1e-2), \
        float(jnp.max(jnp.abs(y1 - y_f32)))
    print("KERNEL_OK")
</pallas_src>

<mosaic_0001>
module attributes {stable_mosaic.version = 11 : i64} {
  func.func @_mlp_kernel(%arg0: i32, %arg1: memref<8x4xbf16, #tpu.memory_space<vmem>>, %arg2: memref<4x256xbf16, #tpu.memory_space<vmem>>, %arg3: memref<1x256xf32, #tpu.memory_space<vmem>>, %arg4: memref<256x256xbf16, #tpu.memory_space<vmem>>, %arg5: memref<1x256xf32, #tpu.memory_space<vmem>>, %arg6: memref<256x256xbf16, #tpu.memory_space<vmem>>, %arg7: memref<1x256xf32, #tpu.memory_space<vmem>>, %arg8: memref<256x256xbf16, #tpu.memory_space<vmem>>, %arg9: memref<1x256xf32, #tpu.memory_space<vmem>>, %arg10: memref<256x256xbf16, #tpu.memory_space<vmem>>, %arg11: memref<1x256xf32, #tpu.memory_space<vmem>>, %arg12: memref<256x256xbf16, #tpu.memory_space<vmem>>, %arg13: memref<1x256xf32, #tpu.memory_space<vmem>>, %arg14: memref<256x256xbf16, #tpu.memory_space<vmem>>, %arg15: memref<1x256xf32, #tpu.memory_space<vmem>>, %arg16: memref<256x128xbf16, #tpu.memory_space<vmem>>, %arg17: memref<1x128xf32, #tpu.memory_space<vmem>>, %arg18: memref<8x128xf32, #tpu.memory_space<vmem>>) attributes {dimension_semantics = [#tpu.dimension_semantics<parallel>], iteration_bounds = array<i64: 1>, scalar_prefetch = 0 : i64, scratch_operands = 0 : i64, tpu.core_type = #tpu.core_type<tc>, window_params = [{transform_indices = @transform_0, window_bounds = array<i64: 8, 4>}, {pipeline_mode = #tpu.pipeline_mode<synchronous>, transform_indices = @transform_1, window_bounds = array<i64: 4, 256>}, {pipeline_mode = #tpu.pipeline_mode<synchronous>, transform_indices = @transform_2, window_bounds = array<i64: 1, 256>}, {pipeline_mode = #tpu.pipeline_mode<synchronous>, transform_indices = @transform_3, window_bounds = array<i64: 256, 256>}, {pipeline_mode = #tpu.pipeline_mode<synchronous>, transform_indices = @transform_4, window_bounds = array<i64: 1, 256>}, {pipeline_mode = #tpu.pipeline_mode<synchronous>, transform_indices = @transform_5, window_bounds = array<i64: 256, 256>}, {pipeline_mode = #tpu.pipeline_mode<synchronous>, transform_indices = @transform_6, window_bounds = array<i64: 1, 256>}, {pipeline_mode = #tpu.pipeline_mode<synchronous>, transform_indices = @transform_7, window_bounds = array<i64: 256, 256>}, {pipeline_mode = #tpu.pipeline_mode<synchronous>, transform_indices = @transform_8, window_bounds = array<i64: 1, 256>}, {pipeline_mode = #tpu.pipeline_mode<synchronous>, transform_indices = @transform_9, window_bounds = array<i64: 256, 256>}, {pipeline_mode = #tpu.pipeline_mode<synchronous>, transform_indices = @transform_10, window_bounds = array<i64: 1, 256>}, {pipeline_mode = #tpu.pipeline_mode<synchronous>, transform_indices = @transform_11, window_bounds = array<i64: 256, 256>}, {pipeline_mode = #tpu.pipeline_mode<synchronous>, transform_indices = @transform_12, window_bounds = array<i64: 1, 256>}, {pipeline_mode = #tpu.pipeline_mode<synchronous>, transform_indices = @transform_13, window_bounds = array<i64: 256, 256>}, {pipeline_mode = #tpu.pipeline_mode<synchronous>, transform_indices = @transform_14, window_bounds = array<i64: 1, 256>}, {pipeline_mode = #tpu.pipeline_mode<synchronous>, transform_indices = @transform_15, window_bounds = array<i64: 256, 128>}, {pipeline_mode = #tpu.pipeline_mode<synchronous>, transform_indices = @transform_16, window_bounds = array<i64: 1, 128>}, {transform_indices = @transform_17, window_bounds = array<i64: 8, 128>}]} {
    %c0 = arith.constant 0 : index
    %c0_0 = arith.constant 0 : index
    %0 = vector.load %arg1[%c0, %c0_0] : memref<8x4xbf16, #tpu.memory_space<vmem>>, vector<8x4xbf16>
    %1 = arith.extf %0 : vector<8x4xbf16> to vector<8x4xf32>
    %c0_1 = arith.constant 0 : index
    %c0_2 = arith.constant 0 : index
    %2 = vector.load %arg2[%c0_1, %c0_2] : memref<4x256xbf16, #tpu.memory_space<vmem>>, vector<4x256xbf16>
    %3 = arith.extf %2 : vector<4x256xbf16> to vector<4x256xf32>
    %4 = vector.extract_strided_slice %1 {offsets = [0, 0], sizes = [8, 1], strides = [1, 1]} : vector<8x4xf32> to vector<8x1xf32>
    %5 = vector.extract_strided_slice %3 {offsets = [0, 0], sizes = [1, 256], strides = [1, 1]} : vector<4x256xf32> to vector<1x256xf32>
    %6 = vector.broadcast %4 : vector<8x1xf32> to vector<8x256xf32>
    %7 = vector.broadcast %5 : vector<1x256xf32> to vector<8x256xf32>
    %8 = arith.mulf %6, %7 : vector<8x256xf32>
    %9 = vector.extract_strided_slice %1 {offsets = [0, 1], sizes = [8, 1], strides = [1, 1]} : vector<8x4xf32> to vector<8x1xf32>
    %10 = vector.extract_strided_slice %3 {offsets = [1, 0], sizes = [1, 256], strides = [1, 1]} : vector<4x256xf32> to vector<1x256xf32>
    %11 = vector.broadcast %9 : vector<8x1xf32> to vector<8x256xf32>
    %12 = vector.broadcast %10 : vector<1x256xf32> to vector<8x256xf32>
    %13 = arith.mulf %11, %12 : vector<8x256xf32>
    %14 = vector.extract_strided_slice %1 {offsets = [0, 2], sizes = [8, 1], strides = [1, 1]} : vector<8x4xf32> to vector<8x1xf32>
    %15 = vector.extract_strided_slice %3 {offsets = [2, 0], sizes = [1, 256], strides = [1, 1]} : vector<4x256xf32> to vector<1x256xf32>
    %16 = vector.broadcast %14 : vector<8x1xf32> to vector<8x256xf32>
    %17 = vector.broadcast %15 : vector<1x256xf32> to vector<8x256xf32>
    %18 = arith.mulf %16, %17 : vector<8x256xf32>
    %19 = vector.extract_strided_slice %1 {offsets = [0, 3], sizes = [8, 1], strides = [1, 1]} : vector<8x4xf32> to vector<8x1xf32>
    %20 = vector.extract_strided_slice %3 {offsets = [3, 0], sizes = [1, 256], strides = [1, 1]} : vector<4x256xf32> to vector<1x256xf32>
    %21 = vector.broadcast %19 : vector<8x1xf32> to vector<8x256xf32>
    %22 = vector.broadcast %20 : vector<1x256xf32> to vector<8x256xf32>
    %23 = arith.mulf %21, %22 : vector<8x256xf32>
    %24 = arith.addf %8, %13 : vector<8x256xf32>
    %25 = arith.addf %18, %23 : vector<8x256xf32>
    %26 = arith.addf %24, %25 : vector<8x256xf32>
    %c0_3 = arith.constant 0 : index
    %c0_4 = arith.constant 0 : index
    %27 = vector.load %arg3[%c0_3, %c0_4] : memref<1x256xf32, #tpu.memory_space<vmem>>, vector<1x256xf32>
    %28 = vector.broadcast %27 : vector<1x256xf32> to vector<8x256xf32>
    %29 = arith.addf %26, %28 : vector<8x256xf32>
    %cst = arith.constant 0.000000e+00 : f32
    %30 = vector.broadcast %cst : f32 to vector<8x256xf32>
    %31 = arith.maximumf %29, %30 : vector<8x256xf32>
    %32 = arith.truncf %31 : vector<8x256xf32> to vector<8x256xbf16>
    %c0_5 = arith.constant 0 : index
    %c0_6 = arith.constant 0 : index
    %33 = vector.load %arg4[%c0_5, %c0_6] : memref<256x256xbf16, #tpu.memory_space<vmem>>, vector<256x256xbf16>
    %cst_7 = arith.constant dense<0.000000e+00> : vector<8x256xf32>
    %34 = tpu.matmul %32, %33, %cst_7 {dimension_numbers = #tpu.dot_dimension_numbers<[1], [0], [0], [1], [0, 0, 1, 1], [], []>} : vector<8x256xbf16>, vector<256x256xbf16>, vector<8x256xf32> -> vector<8x256xf32>
    %c0_8 = arith.constant 0 : index
    %c0_9 = arith.constant 0 : index
    %35 = vector.load %arg5[%c0_8, %c0_9] : memref<1x256xf32, #tpu.memory_space<vmem>>, vector<1x256xf32>
    %36 = vector.broadcast %35 : vector<1x256xf32> to vector<8x256xf32>
    %37 = arith.addf %34, %36 : vector<8x256xf32>
    %cst_10 = arith.constant 0.000000e+00 : f32
    %38 = vector.broadcast %cst_10 : f32 to vector<8x256xf32>
    %39 = arith.maximumf %37, %38 : vector<8x256xf32>
    %40 = arith.truncf %39 : vector<8x256xf32> to vector<8x256xbf16>
    %c0_11 = arith.constant 0 : index
    %c0_12 = arith.constant 0 : index
    %41 = vector.load %arg6[%c0_11, %c0_12] : memref<256x256xbf16, #tpu.memory_space<vmem>>, vector<256x256xbf16>
    %cst_13 = arith.constant dense<0.000000e+00> : vector<8x256xf32>
    %42 = tpu.matmul %40, %41, %cst_13 {dimension_numbers = #tpu.dot_dimension_numbers<[1], [0], [0], [1], [0, 0, 1, 1], [], []>} : vector<8x256xbf16>, vector<256x256xbf16>, vector<8x256xf32> -> vector<8x256xf32>
    %c0_14 = arith.constant 0 : index
    %c0_15 = arith.constant 0 : index
    %43 = vector.load %arg7[%c0_14, %c0_15] : memref<1x256xf32, #tpu.memory_space<vmem>>, vector<1x256xf32>
    %44 = vector.broadcast %43 : vector<1x256xf32> to vector<8x256xf32>
    %45 = arith.addf %42, %44 : vector<8x256xf32>
    %cst_16 = arith.constant 0.000000e+00 : f32
    %46 = vector.broadcast %cst_16 : f32 to vector<8x256xf32>
    %47 = arith.maximumf %45, %46 : vector<8x256xf32>
    %48 = arith.truncf %47 : vector<8x256xf32> to vector<8x256xbf16>
    %c0_17 = arith.constant 0 : index
    %c0_18 = arith.constant 0 : index
    %49 = vector.load %arg8[%c0_17, %c0_18] : memref<256x256xbf16, #tpu.memory_space<vmem>>, vector<256x256xbf16>
    %cst_19 = arith.constant dense<0.000000e+00> : vector<8x256xf32>
    %50 = tpu.matmul %48, %49, %cst_19 {dimension_numbers = #tpu.dot_dimension_numbers<[1], [0], [0], [1], [0, 0, 1, 1], [], []>} : vector<8x256xbf16>, vector<256x256xbf16>, vector<8x256xf32> -> vector<8x256xf32>
    %c0_20 = arith.constant 0 : index
    %c0_21 = arith.constant 0 : index
    %51 = vector.load %arg9[%c0_20, %c0_21] : memref<1x256xf32, #tpu.memory_space<vmem>>, vector<1x256xf32>
    %52 = vector.broadcast %51 : vector<1x256xf32> to vector<8x256xf32>
    %53 = arith.addf %50, %52 : vector<8x256xf32>
    %cst_22 = arith.constant 0.000000e+00 : f32
    %54 = vector.broadcast %cst_22 : f32 to vector<8x256xf32>
    %55 = arith.maximumf %53, %54 : vector<8x256xf32>
    %56 = arith.truncf %55 : vector<8x256xf32> to vector<8x256xbf16>
    %c0_23 = arith.constant 0 : index
    %c0_24 = arith.constant 0 : index
    %57 = vector.load %arg10[%c0_23, %c0_24] : memref<256x256xbf16, #tpu.memory_space<vmem>>, vector<256x256xbf16>
    %cst_25 = arith.constant dense<0.000000e+00> : vector<8x256xf32>
    %58 = tpu.matmul %56, %57, %cst_25 {dimension_numbers = #tpu.dot_dimension_numbers<[1], [0], [0], [1], [0, 0, 1, 1], [], []>} : vector<8x256xbf16>, vector<256x256xbf16>, vector<8x256xf32> -> vector<8x256xf32>
    %c0_26 = arith.constant 0 : index
    %c0_27 = arith.constant 0 : index
    %59 = vector.load %arg11[%c0_26, %c0_27] : memref<1x256xf32, #tpu.memory_space<vmem>>, vector<1x256xf32>
    %60 = vector.broadcast %59 : vector<1x256xf32> to vector<8x256xf32>
    %61 = arith.addf %58, %60 : vector<8x256xf32>
    %cst_28 = arith.constant 0.000000e+00 : f32
    %62 = vector.broadcast %cst_28 : f32 to vector<8x256xf32>
    %63 = arith.maximumf %61, %62 : vector<8x256xf32>
    %64 = arith.truncf %63 : vector<8x256xf32> to vector<8x256xbf16>
    %c0_29 = arith.constant 0 : index
    %c0_30 = arith.constant 0 : index
    %65 = vector.load %arg12[%c0_29, %c0_30] : memref<256x256xbf16, #tpu.memory_space<vmem>>, vector<256x256xbf16>
    %cst_31 = arith.constant dense<0.000000e+00> : vector<8x256xf32>
    %66 = tpu.matmul %64, %65, %cst_31 {dimension_numbers = #tpu.dot_dimension_numbers<[1], [0], [0], [1], [0, 0, 1, 1], [], []>} : vector<8x256xbf16>, vector<256x256xbf16>, vector<8x256xf32> -> vector<8x256xf32>
    %c0_32 = arith.constant 0 : index
    %c0_33 = arith.constant 0 : index
    %67 = vector.load %arg13[%c0_32, %c0_33] : memref<1x256xf32, #tpu.memory_space<vmem>>, vector<1x256xf32>
    %68 = vector.broadcast %67 : vector<1x256xf32> to vector<8x256xf32>
    %69 = arith.addf %66, %68 : vector<8x256xf32>
    %cst_34 = arith.constant 0.000000e+00 : f32
    %70 = vector.broadcast %cst_34 : f32 to vector<8x256xf32>
    %71 = arith.maximumf %69, %70 : vector<8x256xf32>
    %72 = arith.truncf %71 : vector<8x256xf32> to vector<8x256xbf16>
    %c0_35 = arith.constant 0 : index
    %c0_36 = arith.constant 0 : index
    %73 = vector.load %arg14[%c0_35, %c0_36] : memref<256x256xbf16, #tpu.memory_space<vmem>>, vector<256x256xbf16>
    %cst_37 = arith.constant dense<0.000000e+00> : vector<8x256xf32>
    %74 = tpu.matmul %72, %73, %cst_37 {dimension_numbers = #tpu.dot_dimension_numbers<[1], [0], [0], [1], [0, 0, 1, 1], [], []>} : vector<8x256xbf16>, vector<256x256xbf16>, vector<8x256xf32> -> vector<8x256xf32>
    %c0_38 = arith.constant 0 : index
    %c0_39 = arith.constant 0 : index
    %75 = vector.load %arg15[%c0_38, %c0_39] : memref<1x256xf32, #tpu.memory_space<vmem>>, vector<1x256xf32>
    %76 = vector.broadcast %75 : vector<1x256xf32> to vector<8x256xf32>
    %77 = arith.addf %74, %76 : vector<8x256xf32>
    %cst_40 = arith.constant 0.000000e+00 : f32
    %78 = vector.broadcast %cst_40 : f32 to vector<8x256xf32>
    %79 = arith.maximumf %77, %78 : vector<8x256xf32>
    %80 = arith.truncf %79 : vector<8x256xf32> to vector<8x256xbf16>
    %c0_41 = arith.constant 0 : index
    %c0_42 = arith.constant 0 : index
    %81 = vector.load %arg16[%c0_41, %c0_42] : memref<256x128xbf16, #tpu.memory_space<vmem>>, vector<256x128xbf16>
    %cst_43 = arith.constant dense<0.000000e+00> : vector<8x128xf32>
    %82 = tpu.matmul %80, %81, %cst_43 {dimension_numbers = #tpu.dot_dimension_numbers<[1], [0], [0], [1], [0, 0, 1, 1], [], []>} : vector<8x256xbf16>, vector<256x128xbf16>, vector<8x128xf32> -> vector<8x128xf32>
    %c0_44 = arith.constant 0 : index
    %c0_45 = arith.constant 0 : index
    %83 = vector.load %arg17[%c0_44, %c0_45] : memref<1x128xf32, #tpu.memory_space<vmem>>, vector<1x128xf32>
    %84 = vector.broadcast %83 : vector<1x128xf32> to vector<8x128xf32>
    %85 = arith.addf %82, %84 : vector<8x128xf32>
    %c0_46 = arith.constant 0 : index
    %c0_47 = arith.constant 0 : index
    %86 = vector.load %arg18[%c0_46, %c0_47] : memref<8x128xf32, #tpu.memory_space<vmem>>, vector<8x128xf32>
    tpu.vector_store %arg18[%c0_46, %c0_47], %85 {strides = array<i32>} : memref<8x128xf32, #tpu.memory_space<vmem>>, vector<8x128xf32>,
    return
  }
  func.func @transform_0(%arg0: i32) -> (i32, i32) {
    %c0_i32 = arith.constant 0 : i32
    %c0_i32_0 = arith.constant 0 : i32
    return %arg0, %c0_i32 : i32, i32
  }
  func.func @transform_1(%arg0: i32) -> (i32, i32) {
    %c0_i32 = arith.constant 0 : i32
    %c0_i32_0 = arith.constant 0 : i32
    %c0_i32_1 = arith.constant 0 : i32
    return %c0_i32, %c0_i32_0 : i32, i32
  }
  func.func @transform_2(%arg0: i32) -> (i32, i32) {
    %c0_i32 = arith.constant 0 : i32
    %c0_i32_0 = arith.constant 0 : i32
    %c0_i32_1 = arith.constant 0 : i32
    return %c0_i32, %c0_i32_0 : i32, i32
  }
  func.func @transform_3(%arg0: i32) -> (i32, i32) {
    %c0_i32 = arith.constant 0 : i32
    %c0_i32_0 = arith.constant 0 : i32
    %c0_i32_1 = arith.constant 0 : i32
    return %c0_i32, %c0_i32_0 : i32, i32
  }
  func.func @transform_4(%arg0: i32) -> (i32, i32) {
    %c0_i32 = arith.constant 0 : i32
    %c0_i32_0 = arith.constant 0 : i32
    %c0_i32_1 = arith.constant 0 : i32
    return %c0_i32, %c0_i32_0 : i32, i32
  }
  func.func @transform_5(%arg0: i32) -> (i32, i32) {
    %c0_i32 = arith.constant 0 : i32
    %c0_i32_0 = arith.constant 0 : i32
    %c0_i32_1 = arith.constant 0 : i32
    return %c0_i32, %c0_i32_0 : i32, i32
  }
  func.func @transform_6(%arg0: i32) -> (i32, i32) {
    %c0_i32 = arith.constant 0 : i32
    %c0_i32_0 = arith.constant 0 : i32
    %c0_i32_1 = arith.constant 0 : i32
    return %c0_i32, %c0_i32_0 : i32, i32
  }
  func.func @transform_7(%arg0: i32) -> (i32, i32) {
    %c0_i32 = arith.constant 0 : i32
    %c0_i32_0 = arith.constant 0 : i32
    %c0_i32_1 = arith.constant 0 : i32
    return %c0_i32, %c0_i32_0 : i32, i32
  }
  func.func @transform_8(%arg0: i32) -> (i32, i32) {
    %c0_i32 = arith.constant 0 : i32
    %c0_i32_0 = arith.constant 0 : i32
    %c0_i32_1 = arith.constant 0 : i32
    return %c0_i32, %c0_i32_0 : i32, i32
  }
  func.func @transform_9(%arg0: i32) -> (i32, i32) {
    %c0_i32 = arith.constant 0 : i32
    %c0_i32_0 = arith.constant 0 : i32
    %c0_i32_1 = arith.constant 0 : i32
    return %c0_i32, %c0_i32_0 : i32, i32
  }
  func.func @transform_10(%arg0: i32) -> (i32, i32) {
    %c0_i32 = arith.constant 0 : i32
    %c0_i32_0 = arith.constant 0 : i32
    %c0_i32_1 = arith.constant 0 : i32
    return %c0_i32, %c0_i32_0 : i32, i32
  }
  func.func @transform_11(%arg0: i32) -> (i32, i32) {
    %c0_i32 = arith.constant 0 : i32
    %c0_i32_0 = arith.constant 0 : i32
    %c0_i32_1 = arith.constant 0 : i32
    return %c0_i32, %c0_i32_0 : i32, i32
  }
  func.func @transform_12(%arg0: i32) -> (i32, i32) {
    %c0_i32 = arith.constant 0 : i32
    %c0_i32_0 = arith.constant 0 : i32
    %c0_i32_1 = arith.constant 0 : i32
    return %c0_i32, %c0_i32_0 : i32, i32
  }
  func.func @transform_13(%arg0: i32) -> (i32, i32) {
    %c0_i32 = arith.constant 0 : i32
    %c0_i32_0 = arith.constant 0 : i32
    %c0_i32_1 = arith.constant 0 : i32
    return %c0_i32, %c0_i32_0 : i32, i32
  }
  func.func @transform_14(%arg0: i32) -> (i32, i32) {
    %c0_i32 = arith.constant 0 : i32
    %c0_i32_0 = arith.constant 0 : i32
    %c0_i32_1 = arith.constant 0 : i32
    return %c0_i32, %c0_i32_0 : i32, i32
  }
  func.func @transform_15(%arg0: i32) -> (i32, i32) {
    %c0_i32 = arith.constant 0 : i32
    %c0_i32_0 = arith.constant 0 : i32
    %c0_i32_1 = arith.constant 0 : i32
    return %c0_i32, %c0_i32_0 : i32, i32
  }
  func.func @transform_16(%arg0: i32) -> (i32, i32) {
    %c0_i32 = arith.constant 0 : i32
    %c0_i32_0 = arith.constant 0 : i32
    %c0_i32_1 = arith.constant 0 : i32
    return %c0_i32, %c0_i32_0 : i32, i32
  }
  func.func @transform_17(%arg0: i32) -> (i32, i32) {
    %c0_i32 = arith.constant 0 : i32
    %c0_i32_0 = arith.constant 0 : i32
    return %arg0, %c0_i32 : i32, i32
  }
}

</mosaic_0001>

<llo_original>
// kernel: mlp_forward.1
$region0: #{mlp_forward.1}
  #allocation0 [shape = 'u32[]', space=smem, size = 0x4, offset = 0x4, fixed_abs, tag = 'smem constant byte address 0x4 - core index']
  #allocation1 [shape = 'u32[144,128]{1,0:T(1,128)}', space=vmem, size = 0x12000, scoped, tag = 'internal scratch']
  %s0 = inlined_call_operand.vmem [shape: bf16[8,4], index: 0, kind: input, shape index: {}]
  %s1 = inlined_call_operand.vmem [shape: bf16[4,256], index: 1, kind: input, shape index: {}]
  %s2 = inlined_call_operand.vmem [shape: f32[1,256], index: 2, kind: input, shape index: {}]
  %s3 = inlined_call_operand.vmem [shape: bf16[256,256], index: 3, kind: input, shape index: {}]
  %s4 = inlined_call_operand.vmem [shape: f32[1,256], index: 4, kind: input, shape index: {}]
  %s5 = inlined_call_operand.vmem [shape: bf16[256,256], index: 5, kind: input, shape index: {}]
  %s6 = inlined_call_operand.vmem [shape: f32[1,256], index: 6, kind: input, shape index: {}]
  %s7 = inlined_call_operand.vmem [shape: bf16[256,256], index: 7, kind: input, shape index: {}]
  %s8 = inlined_call_operand.vmem [shape: f32[1,256], index: 8, kind: input, shape index: {}]
  %s9 = inlined_call_operand.vmem [shape: bf16[256,256], index: 9, kind: input, shape index: {}]
  %s10 = inlined_call_operand.vmem [shape: f32[1,256], index: 10, kind: input, shape index: {}]
  %s11 = inlined_call_operand.vmem [shape: bf16[256,256], index: 11, kind: input, shape index: {}]
  %s12 = inlined_call_operand.vmem [shape: f32[1,256], index: 12, kind: input, shape index: {}]
  %s13 = inlined_call_operand.vmem [shape: bf16[256,256], index: 13, kind: input, shape index: {}]
  %s14 = inlined_call_operand.vmem [shape: f32[1,256], index: 14, kind: input, shape index: {}]
  %s15 = inlined_call_operand.vmem [shape: bf16[256,128], index: 15, kind: input, shape index: {}]
  %s16 = inlined_call_operand.vmem [shape: f32[1,128], index: 16, kind: input, shape index: {}]
  %s17 = inlined_call_operand.vmem [shape: f32[8,128], index: 17, kind: output, shape index: {}]
  %s18 = sld [smem:[#allocation0]]
  $region78: #{mlp_forward.1} parent=0
    _
  %s20 = ssub.s32 1, %s18
  %s21 = scalar_select 0, %s20, %s18
  // Predicated region
  $region2: #{mlp_forward.1} parent=0 // pred_check
    _
  $region3: #{mlp_forward.1} parent=0 // pred_check_branch
    %23 = sbr.rel (0) target = $region5
  $region4: #{mlp_forward.1} parent=0 // pred_region
    _
  $region5: #{mlp_forward.1} parent=0 // pred_fallthru
    _
  // Predicated region
  $region6: #{mlp_forward.1} parent=0 // pred_check
    _
  $region7: #{mlp_forward.1} parent=0 // pred_check_branch
    %25 = sbr.rel (0) target = $region9
  $region8: #{mlp_forward.1} parent=0 // pred_region
    _
  $region9: #{mlp_forward.1} parent=0 // pred_fallthru
    _
  // Predicated region
  $region10: #{mlp_forward.1} parent=0 // pred_check
    _
  $region11: #{mlp_forward.1} parent=0 // pred_check_branch
    %27 = sbr.rel (0) target = $region13
  $region12: #{mlp_forward.1} parent=0 // pred_region
    _
  $region13: #{mlp_forward.1} parent=0 // pred_fallthru
    _
  // Predicated region
  $region14: #{mlp_forward.1} parent=0 // pred_check
    _
  $region15: #{mlp_forward.1} parent=0 // pred_check_branch
    %29 = sbr.rel (0) target = $region17
  $region16: #{mlp_forward.1} parent=0 // pred_region
    _
  $region17: #{mlp_forward.1} parent=0 // pred_fallthru
    _
  // Predicated region
  $region18: #{mlp_forward.1} parent=0 // pred_check
    _
  $region19: #{mlp_forward.1} parent=0 // pred_check_branch
    %31 = sbr.rel (0) target = $region21
  $region20: #{mlp_forward.1} parent=0 // pred_region
    _
  $region21: #{mlp_forward.1} parent=0 // pred_fallthru
    _
  // Predicated region
  $region22: #{mlp_forward.1} parent=0 // pred_check
    _
  $region23: #{mlp_forward.1} parent=0 // pred_check_branch
    %33 = sbr.rel (0) target = $region25
  $region24: #{mlp_forward.1} parent=0 // pred_region
    _
  $region25: #{mlp_forward.1} parent=0 // pred_fallthru
    _
  // Predicated region
  $region26: #{mlp_forward.1} parent=0 // pred_check
    _
  $region27: #{mlp_forward.1} parent=0 // pred_check_branch
    %35 = sbr.rel (0) target = $region29
  $region28: #{mlp_forward.1} parent=0 // pred_region
    _
  $region29: #{mlp_forward.1} parent=0 // pred_fallthru
    _
  // Predicated region
  $region30: #{mlp_forward.1} parent=0 // pred_check
    _
  $region31: #{mlp_forward.1} parent=0 // pred_check_branch
    %37 = sbr.rel (0) target = $region33
  $region32: #{mlp_forward.1} parent=0 // pred_region
    _
  $region33: #{mlp_forward.1} parent=0 // pred_fallthru
    _
  // Predicated region
  $region34: #{mlp_forward.1} parent=0 // pred_check
    _
  $region35: #{mlp_forward.1} parent=0 // pred_check_branch
    %39 = sbr.rel (0) target = $region37
  $region36: #{mlp_forward.1} parent=0 // pred_region
    _
  $region37: #{mlp_forward.1} parent=0 // pred_fallthru
    _
  // Predicated region
  $region38: #{mlp_forward.1} parent=0 // pred_check
    _
  $region39: #{mlp_forward.1} parent=0 // pred_check_branch
    %41 = sbr.rel (0) target = $region41
  $region40: #{mlp_forward.1} parent=0 // pred_region
    _
  $region41: #{mlp_forward.1} parent=0 // pred_fallthru
    _
  // Predicated region
  $region42: #{mlp_forward.1} parent=0 // pred_check
    _
  $region43: #{mlp_forward.1} parent=0 // pred_check_branch
    %43 = sbr.rel (0) target = $region45
  $region44: #{mlp_forward.1} parent=0 // pred_region
    _
  $region45: #{mlp_forward.1} parent=0 // pred_fallthru
    _
  // Predicated region
  $region46: #{mlp_forward.1} parent=0 // pred_check
    _
  $region47: #{mlp_forward.1} parent=0 // pred_check_branch
    %45 = sbr.rel (0) target = $region49
  $region48: #{mlp_forward.1} parent=0 // pred_region
    _
  $region49: #{mlp_forward.1} parent=0 // pred_fallthru
    _
  // Predicated region
  $region50: #{mlp_forward.1} parent=0 // pred_check
    _
  $region51: #{mlp_forward.1} parent=0 // pred_check_branch
    %47 = sbr.rel (0) target = $region53
  $region52: #{mlp_forward.1} parent=0 // pred_region
    _
  $region53: #{mlp_forward.1} parent=0 // pred_fallthru
    _
  // Predicated region
  $region54: #{mlp_forward.1} parent=0 // pred_check
    _
  $region55: #{mlp_forward.1} parent=0 // pred_check_branch
    %49 = sbr.rel (0) target = $region57
  $region56: #{mlp_forward.1} parent=0 // pred_region
    _
  $region57: #{mlp_forward.1} parent=0 // pred_fallthru
    _
  // Predicated region
  $region58: #{mlp_forward.1} parent=0 // pred_check
    _
  $region59: #{mlp_forward.1} parent=0 // pred_check_branch
    %51 = sbr.rel (0) target = $region61
  $region60: #{mlp_forward.1} parent=0 // pred_region
    _
  $region61: #{mlp_forward.1} parent=0 // pred_fallthru
    _
  // Predicated region
  $region62: #{mlp_forward.1} parent=0 // pred_check
    _
  $region63: #{mlp_forward.1} parent=0 // pred_check_branch
    %53 = sbr.rel (0) target = $region65
  $region64: #{mlp_forward.1} parent=0 // pred_region
    _
  $region65: #{mlp_forward.1} parent=0 // pred_fallthru
    _
  // Predicated region
  $region66: #{mlp_forward.1} parent=0 // pred_check
    _
  $region67: #{mlp_forward.1} parent=0 // pred_check_branch
    %55 = sbr.rel (0) target = $region69
  $region68: #{mlp_forward.1} parent=0 // pred_region
    _
  $region69: #{mlp_forward.1} parent=0 // pred_fallthru
    _
  %v57 = vld [vmem:[%s0] sm:$0xf]
  %v58 = vunpack.c.l.bf16 %v57
  %v59 = vld [vmem:[%s1] sm:$0xf]
  %v60 = vunpack.c.l.bf16 %v59
  %62 = vset.pattern.permute.xlu0 0
  %63 = vperm.xlu0 %62, %v58
  %v64 = vpop.permute.xlu0 %63
  %v67 = vlaneseq
  %v68 = vshrl.u32 %v67, 7
  %v69 = vsub.s32 0, %v68
  %v70 = vrot.slane %v60, %v69
  %v71 = vlaneseq
  %v72 = vshrl.u32 %v71, 7
  %v73 = vsub.s32 4, %v72
  %v74 = vrot.slane %v60, %v73
  %v77 = vlaneseq
  %v78 = vshrl.u32 %v77, 7
  %v79 = vsub.s32 0, %v78
  %v80 = vrot.slane %v70, %v79
  %v81 = vlaneseq
  %v82 = vshrl.u32 %v81, 7
  %v83 = vsub.s32 0, %v82
  %v84 = vrot.slane %v74, %v83
  %v85 = vmul.f32 %v64, %v80
  %v86 = vmul.f32 %v64, %v84
  %87 = vset.pattern.permute.xlu0 1
  %88 = vperm.xlu0 %87, %v58
  %v89 = vpop.permute.xlu0 %88
  %v91 = vlaneseq
  %v92 = vshrl.u32 %v91, 7
  %v93 = vsub.s32 1, %v92
  %v94 = vrot.slane %v60, %v93
  %v95 = vlaneseq
  %v96 = vshrl.u32 %v95, 7
  %v97 = vsub.s32 5, %v96
  %v98 = vrot.slane %v60, %v97
  %v101 = vlaneseq
  %v102 = vshrl.u32 %v101, 7
  %v103 = vsub.s32 1, %v102
  %v104 = vrot.slane %v94, %v103
  %v105 = vlaneseq
  %v106 = vshrl.u32 %v105, 7
  %v107 = vsub.s32 1, %v106
  %v108 = vrot.slane %v98, %v107
  %v109 = vmul.f32 %v89, %v104
  %v110 = vmul.f32 %v89, %v108
  %111 = vset.pattern.permute.xlu0 2
  %112 = vperm.xlu0 %111, %v58
  %v113 = vpop.permute.xlu0 %112
  %v115 = vlaneseq
  %v116 = vshrl.u32 %v115, 7
  %v117 = vsub.s32 2, %v116
  %v118 = vrot.slane %v60, %v117
  %v119 = vlaneseq
  %v120 = vshrl.u32 %v119, 7
  %v121 = vsub.s32 6, %v120
  %v122 = vrot.slane %v60, %v121
  %v125 = vlaneseq
  %v126 = vshrl.u32 %v125, 7
  %v127 = vsub.s32 2, %v126
  %v128 = vrot.slane %v118, %v127
  %v129 = vlaneseq
  %v130 = vshrl.u32 %v129, 7
  %v131 = vsub.s32 2, %v130
  %v132 = vrot.slane %v122, %v131
  %v133 = vmul.f32 %v113, %v128
  %v134 = vmul.f32 %v113, %v132
  %135 = vset.pattern.permute.xlu0 3
  %136 = vperm.xlu0 %135, %v58
  %v137 = vpop.permute.xlu0 %136
  %v139 = vlaneseq
  %v140 = vshrl.u32 %v139, 7
  %v141 = vsub.s32 3, %v140
  %v142 = vrot.slane %v60, %v141
  %v143 = vlaneseq
  %v144 = vshrl.u32 %v143, 7
  %v145 = vsub.s32 7, %v144
  %v146 = vrot.slane %v60, %v145
  %v149 = vlaneseq
  %v150 = vshrl.u32 %v149, 7
  %v151 = vsub.s32 3, %v150
  %v152 = vrot.slane %v142, %v151
  %v153 = vlaneseq
  %v154 = vshrl.u32 %v153, 7
  %v155 = vsub.s32 3, %v154
  %v156 = vrot.slane %v146, %v155
  %v157 = vmul.f32 %v137, %v152
  %v158 = vmul.f32 %v137, %v156
  %v159 = vadd.f32 %v85, %v109
  %v160 = vadd.f32 %v86, %v110
  %v161 = vadd.f32 %v133, %v157
  %v162 = vadd.f32 %v134, %v158
  %v163 = vadd.f32 %v159, %v161
  %v164 = vadd.f32 %v160, %v162
  %v165 = vld [vmem:[%s2] sm:$0x3]
  %v167 = vlaneseq
  %v168 = vshrl.u32 %v167, 7
  %v169 = vsub.s32 0, %v168
  %v170 = vrot.slane %v165, %v169
  %v171 = vlaneseq
  %v172 = vshrl.u32 %v171, 7
  %v173 = vsub.s32 1, %v172
  %v174 = vrot.slane %v165, %v173
  %v177 = vadd.f32 %v163, %v170
  %v178 = vadd.f32 %v164, %v174
  %v179 = vmax.f32 %v177, 0.0
  %v180 = vmax.f32 %v178, 0.0
  %v181 = vpack.c.bf16 %v179, %v179
  %v182 = vpack.c.bf16 %v180, %v180
  %v183 = vld [vmem:[%s3] sm:$0xff]
  %v184 = vld [vmem:[%s3 + $0x8] sm:$0xff]
  %v185 = vld [vmem:[%s3 + $0x10] sm:$0xff]
  %v186 = vld [vmem:[%s3 + $0x18] sm:$0xff]
  %v187 = vld [vmem:[%s3 + $0x20] sm:$0xff]
  %v188 = vld [vmem:[%s3 + $0x28] sm:$0xff]
  %v189 = vld [vmem:[%s3 + $0x30] sm:$0xff]
  %v190 = vld [vmem:[%s3 + $0x38] sm:$0xff]
  %v191 = vld [vmem:[%s3 + $0x40] sm:$0xff]
  %v192 = vld [vmem:[%s3 + $0x48] sm:$0xff]
  %v193 = vld [vmem:[%s3 + $0x50] sm:$0xff]
  %v194 = vld [vmem:[%s3 + $0x58] sm:$0xff]
  %v195 = vld [vmem:[%s3 + $0x60] sm:$0xff]
  %v196 = vld [vmem:[%s3 + $0x68] sm:$0xff]
  %v197 = vld [vmem:[%s3 + $0x70] sm:$0xff]
  %v198 = vld [vmem:[%s3 + $0x78] sm:$0xff]
  %v199 = vld [vmem:[%s3 + $0x80] sm:$0xff]
  %v200 = vld [vmem:[%s3 + $0x88] sm:$0xff]
  %v201 = vld [vmem:[%s3 + $0x90] sm:$0xff]
  %v202 = vld [vmem:[%s3 + $0x98] sm:$0xff]
  %v203 = vld [vmem:[%s3 + $0xa0] sm:$0xff]
  %v204 = vld [vmem:[%s3 + $0xa8] sm:$0xff]
  %v205 = vld [vmem:[%s3 + $0xb0] sm:$0xff]
  %v206 = vld [vmem:[%s3 + $0xb8] sm:$0xff]
  %v207 = vld [vmem:[%s3 + $0xc0] sm:$0xff]
  %v208 = vld [vmem:[%s3 + $0xc8] sm:$0xff]
  %v209 = vld [vmem:[%s3 + $0xd0] sm:$0xff]
  %v210 = vld [vmem:[%s3 + $0xd8] sm:$0xff]
  %v211 = vld [vmem:[%s3 + $0xe0] sm:$0xff]
  %v212 = vld [vmem:[%s3 + $0xe8] sm:$0xff]
  %v213 = vld [vmem:[%s3 + $0xf0] sm:$0xff]
  %v214 = vld [vmem:[%s3 + $0xf8] sm:$0xff]
  %v215 = vld [vmem:[%s4] sm:$0x3]
  %v217 = vlaneseq
  %v218 = vshrl.u32 %v217, 7
  %v219 = vsub.s32 0, %v218
  %v220 = vrot.slane %v215, %v219
  %v221 = vlaneseq
  %v222 = vshrl.u32 %v221, 7
  %v223 = vsub.s32 1, %v222
  %v224 = vrot.slane %v215, %v223
  %v259 = vunpack.c.l.b16 %v183
  %v260 = vunpack.c.h.b16 %v183
  %v261 = vunpack.c.l.b16 %v184
  %v262 = vunpack.c.h.b16 %v184
  %v263 = vunpack.c.l.b16 %v185
  %v264 = vunpack.c.h.b16 %v185
  %v265 = vunpack.c.l.b16 %v186
  %v266 = vunpack.c.h.b16 %v186
  %v267 = vunpack.c.l.b16 %v187
  %v268 = vunpack.c.h.b16 %v187
  %v269 = vunpack.c.l.b16 %v188
  %v270 = vunpack.c.h.b16 %v188
  %v271 = vunpack.c.l.b16 %v189
  %v272 = vunpack.c.h.b16 %v189
  %v273 = vunpack.c.l.b16 %v190
  %v274 = vunpack.c.h.b16 %v190
  %v275 = vunpack.c.l.b16 %v191
  %v276 = vunpack.c.h.b16 %v191
  %v277 = vunpack.c.l.b16 %v192
  %v278 = vunpack.c.h.b16 %v192
  %v279 = vunpack.c.l.b16 %v193
  %v280 = vunpack.c.h.b16 %v193
  %v281 = vunpack.c.l.b16 %v194
  %v282 = vunpack.c.h.b16 %v194
  %v283 = vunpack.c.l.b16 %v195
  %v284 = vunpack.c.h.b16 %v195
  %v285 = vunpack.c.l.b16 %v196
  %v286 = vunpack.c.h.b16 %v196
  %v287 = vunpack.c.l.b16 %v197
  %v288 = vunpack.c.h.b16 %v197
  %v289 = vunpack.c.l.b16 %v198
  %v290 = vunpack.c.h.b16 %v198
  %v291 = vunpack.c.l.b16 %v199
  %v292 = vunpack.c.h.b16 %v199
  %v293 = vunpack.c.l.b16 %v200
  %v294 = vunpack.c.h.b16 %v200
  %v295 = vunpack.c.l.b16 %v201
  %v296 = vunpack.c.h.b16 %v201
  %v297 = vunpack.c.l.b16 %v202
  %v298 = vunpack.c.h.b16 %v202
  %v299 = vunpack.c.l.b16 %v203
  %v300 = vunpack.c.h.b16 %v203
  %v301 = vunpack.c.l.b16 %v204
  %v302 = vunpack.c.h.b16 %v204
  %v303 = vunpack.c.l.b16 %v205
  %v304 = vunpack.c.h.b16 %v205
  %v305 = vunpack.c.l.b16 %v206
  %v306 = vunpack.c.h.b16 %v206
  %v307 = vunpack.c.l.b16 %v207
  %v308 = vunpack.c.h.b16 %v207
  %v309 = vunpack.c.l.b16 %v208
  %v310 = vunpack.c.h.b16 %v208
  %v311 = vunpack.c.l.b16 %v209
  %v312 = vunpack.c.h.b16 %v209
  %v313 = vunpack.c.l.b16 %v210
  %v314 = vunpack.c.h.b16 %v210
  %v315 = vunpack.c.l.b16 %v211
  %v316 = vunpack.c.h.b16 %v211
  %v317 = vunpack.c.l.b16 %v212
  %v318 = vunpack.c.h.b16 %v212
  %v319 = vunpack.c.l.b16 %v213
  %v320 = vunpack.c.h.b16 %v213
  %v321 = vunpack.c.l.b16 %v214
  %v322 = vunpack.c.h.b16 %v214
  %v323 = vpack.c.b16 %v261, %v259
  %v324 = vpack.c.b16 %v262, %v260
  %v325 = vpack.c.b16 %v265, %v263
  %v326 = vpack.c.b16 %v266, %v264
  %v327 = vpack.c.b16 %v269, %v267
  %v328 = vpack.c.b16 %v270, %v268
  %v329 = vpack.c.b16 %v273, %v271
  %v330 = vpack.c.b16 %v274, %v272
  %v331 = vpack.c.b16 %v277, %v275
  %v332 = vpack.c.b16 %v278, %v276
  %v333 = vpack.c.b16 %v281, %v279
  %v334 = vpack.c.b16 %v282, %v280
  %v335 = vpack.c.b16 %v285, %v283
  %v336 = vpack.c.b16 %v286, %v284
  %v337 = vpack.c.b16 %v289, %v287
  %v338 = vpack.c.b16 %v290, %v288
  %v339 = vpack.c.b16 %v293, %v291
  %v340 = vpack.c.b16 %v294, %v292
  %v341 = vpack.c.b16 %v297, %v295
  %v342 = vpack.c.b16 %v298, %v296
  %v343 = vpack.c.b16 %v301, %v299
  %v344 = vpack.c.b16 %v302, %v300
  %v345 = vpack.c.b16 %v305, %v303
  %v346 = vpack.c.b16 %v306, %v304
  %v347 = vpack.c.b16 %v309, %v307
  %v348 = vpack.c.b16 %v310, %v308
  %v349 = vpack.c.b16 %v313, %v311
  %v350 = vpack.c.b16 %v314, %v312
  %v351 = vpack.c.b16 %v317, %v315
  %v352 = vpack.c.b16 %v318, %v316
  %v353 = vpack.c.b16 %v321, %v319
  %v354 = vpack.c.b16 %v322, %v320
  %387 = vmatprep.subr.bf16.mxu0 %v324
  %388 = vmatpush1.bf16.msra.mxu0 %v323
  %389 = vmatprep.subr.bf16.mxu0 %v326
  %390 = vmatpush1.bf16.msra.mxu0 %v325
  %391 = vmatprep.subr.bf16.mxu0 %v328
  %392 = vmatpush1.bf16.msra.mxu0 %v327
  %393 = vmatprep.subr.bf16.mxu0 %v330
  %394 = vmatpush1.bf16.msra.mxu0 %v329
  %395 = vmatprep.subr.bf16.mxu0 %v332
  %396 = vmatpush1.bf16.msra.mxu0 %v331
  %397 = vmatprep.subr.bf16.mxu0 %v334
  %398 = vmatpush1.bf16.msra.mxu0 %v333
  %399 = vmatprep.subr.bf16.mxu0 %v336
  %400 = vmatpush1.bf16.msra.mxu0 %v335
  %401 = vmatprep.subr.bf16.mxu0 %v338
  %402 = vmatpush1.bf16.msra.mxu0 %v337
  %403 = vmatprep.subr.bf16.mxu0 %v340
  %404 = vmatpush1.bf16.msra.mxu0 %v339
  %405 = vmatprep.subr.bf16.mxu0 %v342
  %406 = vmatpush1.bf16.msra.mxu0 %v341
  %407 = vmatprep.subr.bf16.mxu0 %v344
  %408 = vmatpush1.bf16.msra.mxu0 %v343
  %409 = vmatprep.subr.bf16.mxu0 %v346
  %410 = vmatpush1.bf16.msra.mxu0 %v345
  %411 = vmatprep.subr.bf16.mxu0 %v348
  %412 = vmatpush1.bf16.msra.mxu0 %v347
  %413 = vmatprep.subr.bf16.mxu0 %v350
  %414 = vmatpush1.bf16.msra.mxu0 %v349
  %415 = vmatprep.subr.bf16.mxu0 %v352
  %416 = vmatpush1.bf16.msra.mxu0 %v351
  %417 = vmatprep.subr.bf16.mxu0 %v354
  %418 = vmatpush1.bf16.msra.mxu0 %v353
  %419 = vmatprep.mubr.bf16.mxu0 %v182
  %420 = vmatmul.mubr.bf16.gmra.mrb[0].mxu0 %v181
  %v421 = vpop.f32.mrb[0].mxu0
  %v422 = vadd.f32 %v220, %v421
  %v423 = vpop.f32.mrb[0].mxu0
  %v424 = vadd.f32 %v224, %v423
  %v425 = vpop.f32.mrb[0].mxu0
  %v426 = vpop.f32.mrb[0].mxu0
  %427 = vdwg.mxu0
  %v428 = vmax.f32 %v422, 0.0
  %v429 = vmax.f32 %v424, 0.0
  %v430 = vpack.c.bf16 %v428, %v428
  %v431 = vpack.c.bf16 %v429, %v429
  %v432 = vld [vmem:[%s5] sm:$0xff]
  %v433 = vld [vmem:[%s5 + $0x8] sm:$0xff]
  %v434 = vld [vmem:[%s5 + $0x10] sm:$0xff]
  %v435 = vld [vmem:[%s5 + $0x18] sm:$0xff]
  %v436 = vld [vmem:[%s5 + $0x20] sm:$0xff]
  %v437 = vld [vmem:[%s5 + $0x28] sm:$0xff]
  %v438 = vld [vmem:[%s5 + $0x30] sm:$0xff]
  %v439 = vld [vmem:[%s5 + $0x38] sm:$0xff]
  %v440 = vld [vmem:[%s5 + $0x40] sm:$0xff]
  %v441 = vld [vmem:[%s5 + $0x48] sm:$0xff]
  %v442 = vld [vmem:[%s5 + $0x50] sm:$0xff]
  %v443 = vld [vmem:[%s5 + $0x58] sm:$0xff]
  %v444 = vld [vmem:[%s5 + $0x60] sm:$0xff]
  %v445 = vld [vmem:[%s5 + $0x68] sm:$0xff]
  %v446 = vld [vmem:[%s5 + $0x70] sm:$0xff]
  %v447 = vld [vmem:[%s5 + $0x78] sm:$0xff]
  %v448 = vld [vmem:[%s5 + $0x80] sm:$0xff]
  %v449 = vld [vmem:[%s5 + $0x88] sm:$0xff]
  %v450 = vld [vmem:[%s5 + $0x90] sm:$0xff]
  %v451 = vld [vmem:[%s5 + $0x98] sm:$0xff]
  %v452 = vld [vmem:[%s5 + $0xa0] sm:$0xff]
  %v453 = vld [vmem:[%s5 + $0xa8] sm:$0xff]
  %v454 = vld [vmem:[%s5 + $0xb0] sm:$0xff]
  %v455 = vld [vmem:[%s5 + $0xb8] sm:$0xff]
  %v456 = vld [vmem:[%s5 + $0xc0] sm:$0xff]
  %v457 = vld [vmem:[%s5 + $0xc8] sm:$0xff]
  %v458 = vld [vmem:[%s5 + $0xd0] sm:$0xff]
  %v459 = vld [vmem:[%s5 + $0xd8] sm:$0xff]
  %v460 = vld [vmem:[%s5 + $0xe0] sm:$0xff]
  %v461 = vld [vmem:[%s5 + $0xe8] sm:$0xff]
  %v462 = vld [vmem:[%s5 + $0xf0] sm:$0xff]
  %v463 = vld [vmem:[%s5 + $0xf8] sm:$0xff]
  %v464 = vld [vmem:[%s6] sm:$0x3]
  %v466 = vlaneseq
  %v467 = vshrl.u32 %v466, 7
  %v468 = vsub.s32 0, %v467
  %v469 = vrot.slane %v464, %v468
  %v470 = vlaneseq
  %v471 = vshrl.u32 %v470, 7
  %v472 = vsub.s32 1, %v471
  %v473 = vrot.slane %v464, %v472
  %v508 = vunpack.c.l.b16 %v432
  %v509 = vunpack.c.h.b16 %v432
  %v510 = vunpack.c.l.b16 %v433
  %v511 = vunpack.c.h.b16 %v433
  %v512 = vunpack.c.l.b16 %v434
  %v513 = vunpack.c.h.b16 %v434
  %v514 = vunpack.c.l.b16 %v435
  %v515 = vunpack.c.h.b16 %v435
  %v516 = vunpack.c.l.b16 %v436
  %v517 = vunpack.c.h.b16 %v436
  %v518 = vunpack.c.l.b16 %v437
  %v519 = vunpack.c.h.b16 %v437
  %v520 = vunpack.c.l.b16 %v438
  %v521 = vunpack.c.h.b16 %v438
  %v522 = vunpack.c.l.b16 %v439
  %v523 = vunpack.c.h.b16 %v439
  %v524 = vunpack.c.l.b16 %v440
  %v525 = vunpack.c.h.b16 %v440
  %v526 = vunpack.c.l.b16 %v441
  %v527 = vunpack.c.h.b16 %v441
  %v528 = vunpack.c.l.b16 %v442
  %v529 = vunpack.c.h.b16 %v442
  %v530 = vunpack.c.l.b16 %v443
  %v531 = vunpack.c.h.b16 %v443
  %v532 = vunpack.c.l.b16 %v444
  %v533 = vunpack.c.h.b16 %v444
  %v534 = vunpack.c.l.b16 %v445
  %v535 = vunpack.c.h.b16 %v445
  %v536 = vunpack.c.l.b16 %v446
  %v537 = vunpack.c.h.b16 %v446
  %v538 = vunpack.c.l.b16 %v447
  %v539 = vunpack.c.h.b16 %v447
  %v540 = vunpack.c.l.b16 %v448
  %v541 = vunpack.c.h.b16 %v448
  %v542 = vunpack.c.l.b16 %v449
  %v543 = vunpack.c.h.b16 %v449
  %v544 = vunpack.c.l.b16 %v450
  %v545 = vunpack.c.h.b16 %v450
  %v546 = vunpack.c.l.b16 %v451
  %v547 = vunpack.c.h.b16 %v451
  %v548 = vunpack.c.l.b16 %v452
  %v549 = vunpack.c.h.b16 %v452
  %v550 = vunpack.c.l.b16 %v453
  %v551 = vunpack.c.h.b16 %v453
  %v552 = vunpack.c.l.b16 %v454
  %v553 = vunpack.c.h.b16 %v454
  %v554 = vunpack.c.l.b16 %v455
  %v555 = vunpack.c.h.b16 %v455
  %v556 = vunpack.c.l.b16 %v456
  %v557 = vunpack.c.h.b16 %v456
  %v558 = vunpack.c.l.b16 %v457
  %v559 = vunpack.c.h.b16 %v457
  %v560 = vunpack.c.l.b16 %v458
  %v561 = vunpack.c.h.b16 %v458
  %v562 = vunpack.c.l.b16 %v459
  %v563 = vunpack.c.h.b16 %v459
  %v564 = vunpack.c.l.b16 %v460
  %v565 = vunpack.c.h.b16 %v460
  %v566 = vunpack.c.l.b16 %v461
  %v567 = vunpack.c.h.b16 %v461
  %v568 = vunpack.c.l.b16 %v462
  %v569 = vunpack.c.h.b16 %v462
  %v570 = vunpack.c.l.b16 %v463
  %v571 = vunpack.c.h.b16 %v463
  %v572 = vpack.c.b16 %v510, %v508
  %v573 = vpack.c.b16 %v511, %v509
  %v574 = vpack.c.b16 %v514, %v512
  %v575 = vpack.c.b16 %v515, %v513
  %v576 = vpack.c.b16 %v518, %v516
  %v577 = vpack.c.b16 %v519, %v517
  %v578 = vpack.c.b16 %v522, %v520
  %v579 = vpack.c.b16 %v523, %v521
  %v580 = vpack.c.b16 %v526, %v524
  %v581 = vpack.c.b16 %v527, %v525
  %v582 = vpack.c.b16 %v530, %v528
  %v583 = vpack.c.b16 %v531, %v529
  %v584 = vpack.c.b16 %v534, %v532
  %v585 = vpack.c.b16 %v535, %v533
  %v586 = vpack.c.b16 %v538, %v536
  %v587 = vpack.c.b16 %v539, %v537
  %v588 = vpack.c.b16 %v542, %v540
  %v589 = vpack.c.b16 %v543, %v541
  %v590 = vpack.c.b16 %v546, %v544
  %v591 = vpack.c.b16 %v547, %v545
  %v592 = vpack.c.b16 %v550, %v548
  %v593 = vpack.c.b16 %v551, %v549
  %v594 = vpack.c.b16 %v554, %v552
  %v595 = vpack.c.b16 %v555, %v553
  %v596 = vpack.c.b16 %v558, %v556
  %v597 = vpack.c.b16 %v559, %v557
  %v598 = vpack.c.b16 %v562, %v560
  %v599 = vpack.c.b16 %v563, %v561
  %v600 = vpack.c.b16 %v566, %v564
  %v601 = vpack.c.b16 %v567, %v565
  %v602 = vpack.c.b16 %v570, %v568
  %v603 = vpack.c.b16 %v571, %v569
  %636 = vmatprep.subr.bf16.mxu0 %v573
  %637 = vmatpush1.bf16.msra.mxu0 %v572
  %638 = vmatprep.subr.bf16.mxu0 %v575
  %639 = vmatpush1.bf16.msra.mxu0 %v574
  %640 = vmatprep.subr.bf16.mxu0 %v577
  %641 = vmatpush1.bf16.msra.mxu0 %v576
  %642 = vmatprep.subr.bf16.mxu0 %v579
  %643 = vmatpush1.bf16.msra.mxu0 %v578
  %644 = vmatprep.subr.bf16.mxu0 %v581
  %645 = vmatpush1.bf16.msra.mxu0 %v580
  %646 = vmatprep.subr.bf16.mxu0 %v583
  %647 = vmatpush1.bf16.msra.mxu0 %v582
  %648 = vmatprep.subr.bf16.mxu0 %v585
  %649 = vmatpush1.bf16.msra.mxu0 %v584
  %650 = vmatprep.subr.bf16.mxu0 %v587
  %651 = vmatpush1.bf16.msra.mxu0 %v586
  %652 = vmatprep.subr.bf16.mxu0 %v589
  %653 = vmatpush1.bf16.msra.mxu0 %v588
  %654 = vmatprep.subr.bf16.mxu0 %v591
  %655 = vmatpush1.bf16.msra.mxu0 %v590
  %656 = vmatprep.subr.bf16.mxu0 %v593
  %657 = vmatpush1.bf16.msra.mxu0 %v592
  %658 = vmatprep.subr.bf16.mxu0 %v595
  %659 = vmatpush1.bf16.msra.mxu0 %v594
  %660 = vmatprep.subr.bf16.mxu0 %v597
  %661 = vmatpush1.bf16.msra.mxu0 %v596
  %662 = vmatprep.subr.bf16.mxu0 %v599
  %663 = vmatpush1.bf16.msra.mxu0 %v598
  %664 = vmatprep.subr.bf16.mxu0 %v601
  %665 = vmatpush1.bf16.msra.mxu0 %v600
  %666 = vmatprep.subr.bf16.mxu0 %v603
  %667 = vmatpush1.bf16.msra.mxu0 %v602
  %668 = vmatprep.mubr.bf16.mxu0 %v431
  %669 = vmatmul.mubr.bf16.gmra.mrb[0].mxu0 %v430
  %v670 = vpop.f32.mrb[0].mxu0
  %v671 = vadd.f32 %v469, %v670
  %v672 = vpop.f32.mrb[0].mxu0
  %v673 = vadd.f32 %v473, %v672
  %v674 = vpop.f32.mrb[0].mxu0
  %v675 = vpop.f32.mrb[0].mxu0
  %676 = vdwg.mxu0
  %v677 = vmax.f32 %v671, 0.0
  %v678 = vmax.f32 %v673, 0.0
  %v679 = vpack.c.bf16 %v677, %v677
  %v680 = vpack.c.bf16 %v678, %v678
  %v681 = vld [vmem:[%s7] sm:$0xff]
  %v682 = vld [vmem:[%s7 + $0x8] sm:$0xff]
  %v683 = vld [vmem:[%s7 + $0x10] sm:$0xff]
  %v684 = vld [vmem:[%s7 + $0x18] sm:$0xff]
  %v685 = vld [vmem:[%s7 + $0x20] sm:$0xff]
  %v686 = vld [vmem:[%s7 + $0x28] sm:$0xff]
  %v687 = vld [vmem:[%s7 + $0x30] sm:$0xff]
  %v688 = vld [vmem:[%s7 + $0x38] sm:$0xff]
  %v689 = vld [vmem:[%s7 + $0x40] sm:$0xff]
  %v690 = vld [vmem:[%s7 + $0x48] sm:$0xff]
  %v691 = vld [vmem:[%s7 + $0x50] sm:$0xff]
  %v692 = vld [vmem:[%s7 + $0x58] sm:$0xff]
  %v693 = vld [vmem:[%s7 + $0x60] sm:$0xff]
  %v694 = vld [vmem:[%s7 + $0x68] sm:$0xff]
  %v695 = vld [vmem:[%s7 + $0x70] sm:$0xff]
  %v696 = vld [vmem:[%s7 + $0x78] sm:$0xff]
  %v697 = vld [vmem:[%s7 + $0x80] sm:$0xff]
  %v698 = vld [vmem:[%s7 + $0x88] sm:$0xff]
  %v699 = vld [vmem:[%s7 + $0x90] sm:$0xff]
  %v700 = vld [vmem:[%s7 + $0x98] sm:$0xff]
  %v701 = vld [vmem:[%s7 + $0xa0] sm:$0xff]
  %v702 = vld [vmem:[%s7 + $0xa8] sm:$0xff]
  %v703 = vld [vmem:[%s7 + $0xb0] sm:$0xff]
  %v704 = vld [vmem:[%s7 + $0xb8] sm:$0xff]
  %v705 = vld [vmem:[%s7 + $0xc0] sm:$0xff]
  %v706 = vld [vmem:[%s7 + $0xc8] sm:$0xff]
  %v707 = vld [vmem:[%s7 + $0xd0] sm:$0xff]
  %v708 = vld [vmem:[%s7 + $0xd8] sm:$0xff]
  %v709 = vld [vmem:[%s7 + $0xe0] sm:$0xff]
  %v710 = vld [vmem:[%s7 + $0xe8] sm:$0xff]
  %v711 = vld [vmem:[%s7 + $0xf0] sm:$0xff]
  %v712 = vld [vmem:[%s7 + $0xf8] sm:$0xff]
  %v713 = vld [vmem:[%s8] sm:$0x3]
  %v715 = vlaneseq
  %v716 = vshrl.u32 %v715, 7
  %v717 = vsub.s32 0, %v716
  %v718 = vrot.slane %v713, %v717
  %v719 = vlaneseq
  %v720 = vshrl.u32 %v719, 7
  %v721 = vsub.s32 1, %v720
  %v722 = vrot.slane %v713, %v721
  %v757 = vunpack.c.l.b16 %v681
  %v758 = vunpack.c.h.b16 %v681
  %v759 = vunpack.c.l.b16 %v682
  %v760 = vunpack.c.h.b16 %v682
  %v761 = vunpack.c.l.b16 %v683
  %v762 = vunpack.c.h.b16 %v683
  %v763 = vunpack.c.l.b16 %v684
  %v764 = vunpack.c.h.b16 %v684
  %v765 = vunpack.c.l.b16 %v685
  %v766 = vunpack.c.h.b16 %v685
  %v767 = vunpack.c.l.b16 %v686
  %v768 = vunpack.c.h.b16 %v686
  %v769 = vunpack.c.l.b16 %v687
  %v770 = vunpack.c.h.b16 %v687
  %v771 = vunpack.c.l.b16 %v688
  %v772 = vunpack.c.h.b16 %v688
  %v773 = vunpack.c.l.b16 %v689
  %v774 = vunpack.c.h.b16 %v689
  %v775 = vunpack.c.l.b16 %v690
  %v776 = vunpack.c.h.b16 %v690
  %v777 = vunpack.c.l.b16 %v691
  %v778 = vunpack.c.h.b16 %v691
  %v779 = vunpack.c.l.b16 %v692
  %v780 = vunpack.c.h.b16 %v692
  %v781 = vunpack.c.l.b16 %v693
  %v782 = vunpack.c.h.b16 %v693
  %v783 = vunpack.c.l.b16 %v694
  %v784 = vunpack.c.h.b16 %v694
  %v785 = vunpack.c.l.b16 %v695
  %v786 = vunpack.c.h.b16 %v695
  %v787 = vunpack.c.l.b16 %v696
  %v788 = vunpack.c.h.b16 %v696
  %v789 = vunpack.c.l.b16 %v697
  %v790 = vunpack.c.h.b16 %v697
  %v791 = vunpack.c.l.b16 %v698
  %v792 = vunpack.c.h.b16 %v698
  %v793 = vunpack.c.l.b16 %v699
  %v794 = vunpack.c.h.b16 %v699
  %v795 = vunpack.c.l.b16 %v700
  %v796 = vunpack.c.h.b16 %v700
  %v797 = vunpack.c.l.b16 %v701
  %v798 = vunpack.c.h.b16 %v701
  %v799 = vunpack.c.l.b16 %v702
  %v800 = vunpack.c.h.b16 %v702
  %v801 = vunpack.c.l.b16 %v703
  %v802 = vunpack.c.h.b16 %v703
  %v803 = vunpack.c.l.b16 %v704
  %v804 = vunpack.c.h.b16 %v704
  %v805 = vunpack.c.l.b16 %v705
  %v806 = vunpack.c.h.b16 %v705
  %v807 = vunpack.c.l.b16 %v706
  %v808 = vunpack.c.h.b16 %v706
  %v809 = vunpack.c.l.b16 %v707
  %v810 = vunpack.c.h.b16 %v707
  %v811 = vunpack.c.l.b16 %v708
  %v812 = vunpack.c.h.b16 %v708
  %v813 = vunpack.c.l.b16 %v709
  %v814 = vunpack.c.h.b16 %v709
  %v815 = vunpack.c.l.b16 %v710
  %v816 = vunpack.c.h.b16 %v710
  %v817 = vunpack.c.l.b16 %v711
  %v818 = vunpack.c.h.b16 %v711
  %v819 = vunpack.c.l.b16 %v712
  %v820 = vunpack.c.h.b16 %v712
  %v821 = vpack.c.b16 %v759, %v757
  %v822 = vpack.c.b16 %v760, %v758
  %v823 = vpack.c.b16 %v763, %v761
  %v824 = vpack.c.b16 %v764, %v762
  %v825 = vpack.c.b16 %v767, %v765
  %v826 = vpack.c.b16 %v768, %v766
  %v827 = vpack.c.b16 %v771, %v769
  %v828 = vpack.c.b16 %v772, %v770
  %v829 = vpack.c.b16 %v775, %v773
  %v830 = vpack.c.b16 %v776, %v774
  %v831 = vpack.c.b16 %v779, %v777
  %v832 = vpack.c.b16 %v780, %v778
  %v833 = vpack.c.b16 %v783, %v781
  %v834 = vpack.c.b16 %v784, %v782
  %v835 = vpack.c.b16 %v787, %v785
  %v836 = vpack.c.b16 %v788, %v786
  %v837 = vpack.c.b16 %v791, %v789
  %v838 = vpack.c.b16 %v792, %v790
  %v839 = vpack.c.b16 %v795, %v793
  %v840 = vpack.c.b16 %v796, %v794
  %v841 = vpack.c.b16 %v799, %v797
  %v842 = vpack.c.b16 %v800, %v798
  %v843 = vpack.c.b16 %v803, %v801
  %v844 = vpack.c.b16 %v804, %v802
  %v845 = vpack.c.b16 %v807, %v805
  %v846 = vpack.c.b16 %v808, %v806
  %v847 = vpack.c.b16 %v811, %v809
  %v848 = vpack.c.b16 %v812, %v810
  %v849 = vpack.c.b16 %v815, %v813
  %v850 = vpack.c.b16 %v816, %v814
  %v851 = vpack.c.b16 %v819, %v817
  %v852 = vpack.c.b16 %v820, %v818
  %885 = vmatprep.subr.bf16.mxu0 %v822
  %886 = vmatpush1.bf16.msra.mxu0 %v821
  %887 = vmatprep.subr.bf16.mxu0 %v824
  %888 = vmatpush1.bf16.msra.mxu0 %v823
  %889 = vmatprep.subr.bf16.mxu0 %v826
  %890 = vmatpush1.bf16.msra.mxu0 %v825
  %891 = vmatprep.subr.bf16.mxu0 %v828
  %892 = vmatpush1.bf16.msra.mxu0 %v827
  %893 = vmatprep.subr.bf16.mxu0 %v830
  %894 = vmatpush1.bf16.msra.mxu0 %v829
  %895 = vmatprep.subr.bf16.mxu0 %v832
  %896 = vmatpush1.bf16.msra.mxu0 %v831
  %897 = vmatprep.subr.bf16.mxu0 %v834
  %898 = vmatpush1.bf16.msra.mxu0 %v833
  %899 = vmatprep.subr.bf16.mxu0 %v836
  %900 = vmatpush1.bf16.msra.mxu0 %v835
  %901 = vmatprep.subr.bf16.mxu0 %v838
  %902 = vmatpush1.bf16.msra.mxu0 %v837
  %903 = vmatprep.subr.bf16.mxu0 %v840
  %904 = vmatpush1.bf16.msra.mxu0 %v839
  %905 = vmatprep.subr.bf16.mxu0 %v842
  %906 = vmatpush1.bf16.msra.mxu0 %v841
  %907 = vmatprep.subr.bf16.mxu0 %v844
  %908 = vmatpush1.bf16.msra.mxu0 %v843
  %909 = vmatprep.subr.bf16.mxu0 %v846
  %910 = vmatpush1.bf16.msra.mxu0 %v845
  %911 = vmatprep.subr.bf16.mxu0 %v848
  %912 = vmatpush1.bf16.msra.mxu0 %v847
  %913 = vmatprep.subr.bf16.mxu0 %v850
  %914 = vmatpush1.bf16.msra.mxu0 %v849
  %915 = vmatprep.subr.bf16.mxu0 %v852
  %916 = vmatpush1.bf16.msra.mxu0 %v851
  %917 = vmatprep.mubr.bf16.mxu0 %v680
  %918 = vmatmul.mubr.bf16.gmra.mrb[0].mxu0 %v679
  %v919 = vpop.f32.mrb[0].mxu0
  %v920 = vadd.f32 %v718, %v919
  %v921 = vpop.f32.mrb[0].mxu0
  %v922 = vadd.f32 %v722, %v921
  %v923 = vpop.f32.mrb[0].mxu0
  %v924 = vpop.f32.mrb[0].mxu0
  %925 = vdwg.mxu0
  %v926 = vmax.f32 %v920, 0.0
  %v927 = vmax.f32 %v922, 0.0
  %v928 = vpack.c.bf16 %v926, %v926
  %v929 = vpack.c.bf16 %v927, %v927
  %v930 = vld [vmem:[%s9] sm:$0xff]
  %v931 = vld [vmem:[%s9 + $0x8] sm:$0xff]
  %v932 = vld [vmem:[%s9 + $0x10] sm:$0xff]
  %v933 = vld [vmem:[%s9 + $0x18] sm:$0xff]
  %v934 = vld [vmem:[%s9 + $0x20] sm:$0xff]
  %v935 = vld [vmem:[%s9 + $0x28] sm:$0xff]
  %v936 = vld [vmem:[%s9 + $0x30] sm:$0xff]
  %v937 = vld [vmem:[%s9 + $0x38] sm:$0xff]
  %v938 = vld [vmem:[%s9 + $0x40] sm:$0xff]
  %v939 = vld [vmem:[%s9 + $0x48] sm:$0xff]
  %v940 = vld [vmem:[%s9 + $0x50] sm:$0xff]
  %v941 = vld [vmem:[%s9 + $0x58] sm:$0xff]
  %v942 = vld [vmem:[%s9 + $0x60] sm:$0xff]
  %v943 = vld [vmem:[%s9 + $0x68] sm:$0xff]
  %v944 = vld [vmem:[%s9 + $0x70] sm:$0xff]
  %v945 = vld [vmem:[%s9 + $0x78] sm:$0xff]
  %v946 = vld [vmem:[%s9 + $0x80] sm:$0xff]
  %v947 = vld [vmem:[%s9 + $0x88] sm:$0xff]
  %v948 = vld [vmem:[%s9 + $0x90] sm:$0xff]
  %v949 = vld [vmem:[%s9 + $0x98] sm:$0xff]
  %v950 = vld [vmem:[%s9 + $0xa0] sm:$0xff]
  %v951 = vld [vmem:[%s9 + $0xa8] sm:$0xff]
  %v952 = vld [vmem:[%s9 + $0xb0] sm:$0xff]
  %v953 = vld [vmem:[%s9 + $0xb8] sm:$0xff]
  %v954 = vld [vmem:[%s9 + $0xc0] sm:$0xff]
  %v955 = vld [vmem:[%s9 + $0xc8] sm:$0xff]
  %v956 = vld [vmem:[%s9 + $0xd0] sm:$0xff]
  %v957 = vld [vmem:[%s9 + $0xd8] sm:$0xff]
  %v958 = vld [vmem:[%s9 + $0xe0] sm:$0xff]
  %v959 = vld [vmem:[%s9 + $0xe8] sm:$0xff]
  %v960 = vld [vmem:[%s9 + $0xf0] sm:$0xff]
  %v961 = vld [vmem:[%s9 + $0xf8] sm:$0xff]
  %v962 = vld [vmem:[%s10] sm:$0x3]
  %v964 = vlaneseq
  %v965 = vshrl.u32 %v964, 7
  %v966 = vsub.s32 0, %v965
  %v967 = vrot.slane %v962, %v966
  %v968 = vlaneseq
  %v969 = vshrl.u32 %v968, 7
  %v970 = vsub.s32 1, %v969
  %v971 = vrot.slane %v962, %v970
  %v1006 = vunpack.c.l.b16 %v930
  %v1007 = vunpack.c.h.b16 %v930
  %v1008 = vunpack.c.l.b16 %v931
  %v1009 = vunpack.c.h.b16 %v931
  %v1010 = vunpack.c.l.b16 %v932
  %v1011 = vunpack.c.h.b16 %v932
  %v1012 = vunpack.c.l.b16 %v933
  %v1013 = vunpack.c.h.b16 %v933
  %v1014 = vunpack.c.l.b16 %v934
  %v1015 = vunpack.c.h.b16 %v934
  %v1016 = vunpack.c.l.b16 %v935
  %v1017 = vunpack.c.h.b16 %v935
  %v1018 = vunpack.c.l.b16 %v936
  %v1019 = vunpack.c.h.b16 %v936
  %v1020 = vunpack.c.l.b16 %v937
  %v1021 = vunpack.c.h.b16 %v937
  %v1022 = vunpack.c.l.b16 %v938
  %v1023 = vunpack.c.h.b16 %v938
  %v1024 = vunpack.c.l.b16 %v939
  %v1025 = vunpack.c.h.b16 %v939
  %v1026 = vunpack.c.l.b16 %v940
  %v1027 = vunpack.c.h.b16 %v940
  %v1028 = vunpack.c.l.b16 %v941
  %v1029 = vunpack.c.h.b16 %v941
  %v1030 = vunpack.c.l.b16 %v942
  %v1031 = vunpack.c.h.b16 %v942
  %v1032 = vunpack.c.l.b16 %v943
  %v1033 = vunpack.c.h.b16 %v943
  %v1034 = vunpack.c.l.b16 %v944
  %v1035 = vunpack.c.h.b16 %v944
  %v1036 = vunpack.c.l.b16 %v945
  %v1037 = vunpack.c.h.b16 %v945
  %v1038 = vunpack.c.l.b16 %v946
  %v1039 = vunpack.c.h.b16 %v946
  %v1040 = vunpack.c.l.b16 %v947
  %v1041 = vunpack.c.h.b16 %v947
  %v1042 = vunpack.c.l.b16 %v948
  %v1043 = vunpack.c.h.b16 %v948
  %v1044 = vunpack.c.l.b16 %v949
  %v1045 = vunpack.c.h.b16 %v949
  %v1046 = vunpack.c.l.b16 %v950
  %v1047 = vunpack.c.h.b16 %v950
  %v1048 = vunpack.c.l.b16 %v951
  %v1049 = vunpack.c.h.b16 %v951
  %v1050 = vunpack.c.l.b16 %v952
  %v1051 = vunpack.c.h.b16 %v952
  %v1052 = vunpack.c.l.b16 %v953
  %v1053 = vunpack.c.h.b16 %v953
  %v1054 = vunpack.c.l.b16 %v954
  %v1055 = vunpack.c.h.b16 %v954
  %v1056 = vunpack.c.l.b16 %v955
  %v1057 = vunpack.c.h.b16 %v955
  %v1058 = vunpack.c.l.b16 %v956
  %v1059 = vunpack.c.h.b16 %v956
  %v1060 = vunpack.c.l.b16 %v957
  %v1061 = vunpack.c.h.b16 %v957
  %v1062 = vunpack.c.l.b16 %v958
  %v1063 = vunpack.c.h.b16 %v958
  %v1064 = vunpack.c.l.b16 %v959
  %v1065 = vunpack.c.h.b16 %v959
  %v1066 = vunpack.c.l.b16 %v960
  %v1067 = vunpack.c.h.b16 %v960
  %v1068 = vunpack.c.l.b16 %v961
  %v1069 = vunpack.c.h.b16 %v961
  %v1070 = vpack.c.b16 %v1008, %v1006
  %v1071 = vpack.c.b16 %v1009, %v1007
  %v1072 = vpack.c.b16 %v1012, %v1010
  %v1073 = vpack.c.b16 %v1013, %v1011
  %v1074 = vpack.c.b16 %v1016, %v1014
  %v1075 = vpack.c.b16 %v1017, %v1015
  %v1076 = vpack.c.b16 %v1020, %v1018
  %v1077 = vpack.c.b16 %v1021, %v1019
  %v1078 = vpack.c.b16 %v1024, %v1022
  %v1079 = vpack.c.b16 %v1025, %v1023
  %v1080 = vpack.c.b16 %v1028, %v1026
  %v1081 = vpack.c.b16 %v1029, %v1027
  %v1082 = vpack.c.b16 %v1032, %v1030
  %v1083 = vpack.c.b16 %v1033, %v1031
  %v1084 = vpack.c.b16 %v1036, %v1034
  %v1085 = vpack.c.b16 %v1037, %v1035
  %v1086 = vpack.c.b16 %v1040, %v1038
  %v1087 = vpack.c.b16 %v1041, %v1039
  %v1088 = vpack.c.b16 %v1044, %v1042
  %v1089 = vpack.c.b16 %v1045, %v1043
  %v1090 = vpack.c.b16 %v1048, %v1046
  %v1091 = vpack.c.b16 %v1049, %v1047
  %v1092 = vpack.c.b16 %v1052, %v1050
  %v1093 = vpack.c.b16 %v1053, %v1051
  %v1094 = vpack.c.b16 %v1056, %v1054
  %v1095 = vpack.c.b16 %v1057, %v1055
  %v1096 = vpack.c.b16 %v1060, %v1058
  %v1097 = vpack.c.b16 %v1061, %v1059
  %v1098 = vpack.c.b16 %v1064, %v1062
  %v1099 = vpack.c.b16 %v1065, %v1063
  %v1100 = vpack.c.b16 %v1068, %v1066
  %v1101 = vpack.c.b16 %v1069, %v1067
  %1134 = vmatprep.subr.bf16.mxu0 %v1071
  %1135 = vmatpush1.bf16.msra.mxu0 %v1070
  %1136 = vmatprep.subr.bf16.mxu0 %v1073
  %1137 = vmatpush1.bf16.msra.mxu0 %v1072
  %1138 = vmatprep.subr.bf16.mxu0 %v1075
  %1139 = vmatpush1.bf16.msra.mxu0 %v1074
  %1140 = vmatprep.subr.bf16.mxu0 %v1077
  %1141 = vmatpush1.bf16.msra.mxu0 %v1076
  %1142 = vmatprep.subr.bf16.mxu0 %v1079
  %1143 = vmatpush1.bf16.msra.mxu0 %v1078
  %1144 = vmatprep.subr.bf16.mxu0 %v1081
  %1145 = vmatpush1.bf16.msra.mxu0 %v1080
  %1146 = vmatprep.subr.bf16.mxu0 %v1083
  %1147 = vmatpush1.bf16.msra.mxu0 %v1082
  %1148 = vmatprep.subr.bf16.mxu0 %v1085
  %1149 = vmatpush1.bf16.msra.mxu0 %v1084
  %1150 = vmatprep.subr.bf16.mxu0 %v1087
  %1151 = vmatpush1.bf16.msra.mxu0 %v1086
  %1152 = vmatprep.subr.bf16.mxu0 %v1089
  %1153 = vmatpush1.bf16.msra.mxu0 %v1088
  %1154 = vmatprep.subr.bf16.mxu0 %v1091
  %1155 = vmatpush1.bf16.msra.mxu0 %v1090
  %1156 = vmatprep.subr.bf16.mxu0 %v1093
  %1157 = vmatpush1.bf16.msra.mxu0 %v1092
  %1158 = vmatprep.subr.bf16.mxu0 %v1095
  %1159 = vmatpush1.bf16.msra.mxu0 %v1094
  %1160 = vmatprep.subr.bf16.mxu0 %v1097
  %1161 = vmatpush1.bf16.msra.mxu0 %v1096
  %1162 = vmatprep.subr.bf16.mxu0 %v1099
  %1163 = vmatpush1.bf16.msra.mxu0 %v1098
  %1164 = vmatprep.subr.bf16.mxu0 %v1101
  %1165 = vmatpush1.bf16.msra.mxu0 %v1100
  %1166 = vmatprep.mubr.bf16.mxu0 %v929
  %1167 = vmatmul.mubr.bf16.gmra.mrb[0].mxu0 %v928
  %v1168 = vpop.f32.mrb[0].mxu0
  %v1169 = vadd.f32 %v967, %v1168
  %v1170 = vpop.f32.mrb[0].mxu0
  %v1171 = vadd.f32 %v971, %v1170
  %v1172 = vpop.f32.mrb[0].mxu0
  %v1173 = vpop.f32.mrb[0].mxu0
  %1174 = vdwg.mxu0
  %v1175 = vmax.f32 %v1169, 0.0
  %v1176 = vmax.f32 %v1171, 0.0
  %v1177 = vpack.c.bf16 %v1175, %v1175
  %v1178 = vpack.c.bf16 %v1176, %v1176
  %v1179 = vld [vmem:[%s11] sm:$0xff]
  %v1180 = vld [vmem:[%s11 + $0x8] sm:$0xff]
  %v1181 = vld [vmem:[%s11 + $0x10] sm:$0xff]
  %v1182 = vld [vmem:[%s11 + $0x18] sm:$0xff]
  %v1183 = vld [vmem:[%s11 + $0x20] sm:$0xff]
  %v1184 = vld [vmem:[%s11 + $0x28] sm:$0xff]
  %v1185 = vld [vmem:[%s11 + $0x30] sm:$0xff]
  %v1186 = vld [vmem:[%s11 + $0x38] sm:$0xff]
  %v1187 = vld [vmem:[%s11 + $0x40] sm:$0xff]
  %v1188 = vld [vmem:[%s11 + $0x48] sm:$0xff]
  %v1189 = vld [vmem:[%s11 + $0x50] sm:$0xff]
  %v1190 = vld [vmem:[%s11 + $0x58] sm:$0xff]
  %v1191 = vld [vmem:[%s11 + $0x60] sm:$0xff]
  %v1192 = vld [vmem:[%s11 + $0x68] sm:$0xff]
  %v1193 = vld [vmem:[%s11 + $0x70] sm:$0xff]
  %v1194 = vld [vmem:[%s11 + $0x78] sm:$0xff]
  %v1195 = vld [vmem:[%s11 + $0x80] sm:$0xff]
  %v1196 = vld [vmem:[%s11 + $0x88] sm:$0xff]
  %v1197 = vld [vmem:[%s11 + $0x90] sm:$0xff]
  %v1198 = vld [vmem:[%s11 + $0x98] sm:$0xff]
  %v1199 = vld [vmem:[%s11 + $0xa0] sm:$0xff]
  %v1200 = vld [vmem:[%s11 + $0xa8] sm:$0xff]
  %v1201 = vld [vmem:[%s11 + $0xb0] sm:$0xff]
  %v1202 = vld [vmem:[%s11 + $0xb8] sm:$0xff]
  %v1203 = vld [vmem:[%s11 + $0xc0] sm:$0xff]
  %v1204 = vld [vmem:[%s11 + $0xc8] sm:$0xff]
  %v1205 = vld [vmem:[%s11 + $0xd0] sm:$0xff]
  %v1206 = vld [vmem:[%s11 + $0xd8] sm:$0xff]
  %v1207 = vld [vmem:[%s11 + $0xe0] sm:$0xff]
  %v1208 = vld [vmem:[%s11 + $0xe8] sm:$0xff]
  %v1209 = vld [vmem:[%s11 + $0xf0] sm:$0xff]
  %v1210 = vld [vmem:[%s11 + $0xf8] sm:$0xff]
  %v1211 = vld [vmem:[%s12] sm:$0x3]
  %v1213 = vlaneseq
  %v1214 = vshrl.u32 %v1213, 7
  %v1215 = vsub.s32 0, %v1214
  %v1216 = vrot.slane %v1211, %v1215
  %v1217 = vlaneseq
  %v1218 = vshrl.u32 %v1217, 7
  %v1219 = vsub.s32 1, %v1218
  %v1220 = vrot.slane %v1211, %v1219
  %v1255 = vunpack.c.l.b16 %v1179
  %v1256 = vunpack.c.h.b16 %v1179
  %v1257 = vunpack.c.l.b16 %v1180
  %v1258 = vunpack.c.h.b16 %v1180
  %v1259 = vunpack.c.l.b16 %v1181
  %v1260 = vunpack.c.h.b16 %v1181
  %v1261 = vunpack.c.l.b16 %v1182
  %v1262 = vunpack.c.h.b16 %v1182
  %v1263 = vunpack.c.l.b16 %v1183
  %v1264 = vunpack.c.h.b16 %v1183
  %v1265 = vunpack.c.l.b16 %v1184
  %v1266 = vunpack.c.h.b16 %v1184
  %v1267 = vunpack.c.l.b16 %v1185
  %v1268 = vunpack.c.h.b16 %v1185
  %v1269 = vunpack.c.l.b16 %v1186
  %v1270 = vunpack.c.h.b16 %v1186
  %v1271 = vunpack.c.l.b16 %v1187
  %v1272 = vunpack.c.h.b16 %v1187
  %v1273 = vunpack.c.l.b16 %v1188
  %v1274 = vunpack.c.h.b16 %v1188
  %v1275 = vunpack.c.l.b16 %v1189
  %v1276 = vunpack.c.h.b16 %v1189
  %v1277 = vunpack.c.l.b16 %v1190
  %v1278 = vunpack.c.h.b16 %v1190
  %v1279 = vunpack.c.l.b16 %v1191
  %v1280 = vunpack.c.h.b16 %v1191
  %v1281 = vunpack.c.l.b16 %v1192
  %v1282 = vunpack.c.h.b16 %v1192
  %v1283 = vunpack.c.l.b16 %v1193
  %v1284 = vunpack.c.h.b16 %v1193
  %v1285 = vunpack.c.l.b16 %v1194
  %v1286 = vunpack.c.h.b16 %v1194
  %v1287 = vunpack.c.l.b16 %v1195
  %v1288 = vunpack.c.h.b16 %v1195
  %v1289 = vunpack.c.l.b16 %v1196
  %v1290 = vunpack.c.h.b16 %v1196
  %v1291 = vunpack.c.l.b16 %v1197
  %v1292 = vunpack.c.h.b16 %v1197
  %v1293 = vunpack.c.l.b16 %v1198
  %v1294 = vunpack.c.h.b16 %v1198
  %v1295 = vunpack.c.l.b16 %v1199
  %v1296 = vunpack.c.h.b16 %v1199
  %v1297 = vunpack.c.l.b16 %v1200
  %v1298 = vunpack.c.h.b16 %v1200
  %v1299 = vunpack.c.l.b16 %v1201
  %v1300 = vunpack.c.h.b16 %v1201
  %v1301 = vunpack.c.l.b16 %v1202
  %v1302 = vunpack.c.h.b16 %v1202
  %v1303 = vunpack.c.l.b16 %v1203
  %v1304 = vunpack.c.h.b16 %v1203
  %v1305 = vunpack.c.l.b16 %v1204
  %v1306 = vunpack.c.h.b16 %v1204
  %v1307 = vunpack.c.l.b16 %v1205
  %v1308 = vunpack.c.h.b16 %v1205
  %v1309 = vunpack.c.l.b16 %v1206
  %v1310 = vunpack.c.h.b16 %v1206
  %v1311 = vunpack.c.l.b16 %v1207
  %v1312 = vunpack.c.h.b16 %v1207
  %v1313 = vunpack.c.l.b16 %v1208
  %v1314 = vunpack.c.h.b16 %v1208
  %v1315 = vunpack.c.l.b16 %v1209
  %v1316 = vunpack.c.h.b16 %v1209
  %v1317 = vunpack.c.l.b16 %v1210
  %v1318 = vunpack.c.h.b16 %v1210
  %v1319 = vpack.c.b16 %v1257, %v1255
  %v1320 = vpack.c.b16 %v1258, %v1256
  %v1321 = vpack.c.b16 %v1261, %v1259
  %v1322 = vpack.c.b16 %v1262, %v1260
  %v1323 = vpack.c.b16 %v1265, %v1263
  %v1324 = vpack.c.b16 %v1266, %v1264
  %v1325 = vpack.c.b16 %v1269, %v1267
  %v1326 = vpack.c.b16 %v1270, %v1268
  %v1327 = vpack.c.b16 %v1273, %v1271
  %v1328 = vpack.c.b16 %v1274, %v1272
  %v1329 = vpack.c.b16 %v1277, %v1275
  %v1330 = vpack.c.b16 %v1278, %v1276
  %v1331 = vpack.c.b16 %v1281, %v1279
  %v1332 = vpack.c.b16 %v1282, %v1280
  %v1333 = vpack.c.b16 %v1285, %v1283
  %v1334 = vpack.c.b16 %v1286, %v1284
  %v1335 = vpack.c.b16 %v1289, %v1287
  %v1336 = vpack.c.b16 %v1290, %v1288
  %v1337 = vpack.c.b16 %v1293, %v1291
  %v1338 = vpack.c.b16 %v1294, %v1292
  %v1339 = vpack.c.b16 %v1297, %v1295
  %v1340 = vpack.c.b16 %v1298, %v1296
  %v1341 = vpack.c.b16 %v1301, %v1299
  %v1342 = vpack.c.b16 %v1302, %v1300
  %v1343 = vpack.c.b16 %v1305, %v1303
  %v1344 = vpack.c.b16 %v1306, %v1304
  %v1345 = vpack.c.b16 %v1309, %v1307
  %v1346 = vpack.c.b16 %v1310, %v1308
  %v1347 = vpack.c.b16 %v1313, %v1311
  %v1348 = vpack.c.b16 %v1314, %v1312
  %v1349 = vpack.c.b16 %v1317, %v1315
  %v1350 = vpack.c.b16 %v1318, %v1316
  %1383 = vmatprep.subr.bf16.mxu0 %v1320
  %1384 = vmatpush1.bf16.msra.mxu0 %v1319
  %1385 = vmatprep.subr.bf16.mxu0 %v1322
  %1386 = vmatpush1.bf16.msra.mxu0 %v1321
  %1387 = vmatprep.subr.bf16.mxu0 %v1324
  %1388 = vmatpush1.bf16.msra.mxu0 %v1323
  %1389 = vmatprep.subr.bf16.mxu0 %v1326
  %1390 = vmatpush1.bf16.msra.mxu0 %v1325
  %1391 = vmatprep.subr.bf16.mxu0 %v1328
  %1392 = vmatpush1.bf16.msra.mxu0 %v1327
  %1393 = vmatprep.subr.bf16.mxu0 %v1330
  %1394 = vmatpush1.bf16.msra.mxu0 %v1329
  %1395 = vmatprep.subr.bf16.mxu0 %v1332
  %1396 = vmatpush1.bf16.msra.mxu0 %v1331
  %1397 = vmatprep.subr.bf16.mxu0 %v1334
  %1398 = vmatpush1.bf16.msra.mxu0 %v1333
  %1399 = vmatprep.subr.bf16.mxu0 %v1336
  %1400 = vmatpush1.bf16.msra.mxu0 %v1335
  %1401 = vmatprep.subr.bf16.mxu0 %v1338
  %1402 = vmatpush1.bf16.msra.mxu0 %v1337
  %1403 = vmatprep.subr.bf16.mxu0 %v1340
  %1404 = vmatpush1.bf16.msra.mxu0 %v1339
  %1405 = vmatprep.subr.bf16.mxu0 %v1342
  %1406 = vmatpush1.bf16.msra.mxu0 %v1341
  %1407 = vmatprep.subr.bf16.mxu0 %v1344
  %1408 = vmatpush1.bf16.msra.mxu0 %v1343
  %1409 = vmatprep.subr.bf16.mxu0 %v1346
  %1410 = vmatpush1.bf16.msra.mxu0 %v1345
  %1411 = vmatprep.subr.bf16.mxu0 %v1348
  %1412 = vmatpush1.bf16.msra.mxu0 %v1347
  %1413 = vmatprep.subr.bf16.mxu0 %v1350
  %1414 = vmatpush1.bf16.msra.mxu0 %v1349
  %1415 = vmatprep.mubr.bf16.mxu0 %v1178
  %1416 = vmatmul.mubr.bf16.gmra.mrb[0].mxu0 %v1177
  %v1417 = vpop.f32.mrb[0].mxu0
  %v1418 = vadd.f32 %v1216, %v1417
  %v1419 = vpop.f32.mrb[0].mxu0
  %v1420 = vadd.f32 %v1220, %v1419
  %v1421 = vpop.f32.mrb[0].mxu0
  %v1422 = vpop.f32.mrb[0].mxu0
  %1423 = vdwg.mxu0
  %v1424 = vmax.f32 %v1418, 0.0
  %v1425 = vmax.f32 %v1420, 0.0
  %v1426 = vpack.c.bf16 %v1424, %v1424
  %v1427 = vpack.c.bf16 %v1425, %v1425
  %v1428 = vld [vmem:[%s13] sm:$0xff]
  %v1429 = vld [vmem:[%s13 + $0x8] sm:$0xff]
  %v1430 = vld [vmem:[%s13 + $0x10] sm:$0xff]
  %v1431 = vld [vmem:[%s13 + $0x18] sm:$0xff]
  %v1432 = vld [vmem:[%s13 + $0x20] sm:$0xff]
  %v1433 = vld [vmem:[%s13 + $0x28] sm:$0xff]
  %v1434 = vld [vmem:[%s13 + $0x30] sm:$0xff]
  %v1435 = vld [vmem:[%s13 + $0x38] sm:$0xff]
  %v1436 = vld [vmem:[%s13 + $0x40] sm:$0xff]
  %v1437 = vld [vmem:[%s13 + $0x48] sm:$0xff]
  %v1438 = vld [vmem:[%s13 + $0x50] sm:$0xff]
  %v1439 = vld [vmem:[%s13 + $0x58] sm:$0xff]
  %v1440 = vld [vmem:[%s13 + $0x60] sm:$0xff]
  %v1441 = vld [vmem:[%s13 + $0x68] sm:$0xff]
  %v1442 = vld [vmem:[%s13 + $0x70] sm:$0xff]
  %v1443 = vld [vmem:[%s13 + $0x78] sm:$0xff]
  %v1444 = vld [vmem:[%s13 + $0x80] sm:$0xff]
  %v1445 = vld [vmem:[%s13 + $0x88] sm:$0xff]
  %v1446 = vld [vmem:[%s13 + $0x90] sm:$0xff]
  %v1447 = vld [vmem:[%s13 + $0x98] sm:$0xff]
  %v1448 = vld [vmem:[%s13 + $0xa0] sm:$0xff]
  %v1449 = vld [vmem:[%s13 + $0xa8] sm:$0xff]
  %v1450 = vld [vmem:[%s13 + $0xb0] sm:$0xff]
  %v1451 = vld [vmem:[%s13 + $0xb8] sm:$0xff]
  %v1452 = vld [vmem:[%s13 + $0xc0] sm:$0xff]
  %v1453 = vld [vmem:[%s13 + $0xc8] sm:$0xff]
  %v1454 = vld [vmem:[%s13 + $0xd0] sm:$0xff]
  %v1455 = vld [vmem:[%s13 + $0xd8] sm:$0xff]
  %v1456 = vld [vmem:[%s13 + $0xe0] sm:$0xff]
  %v1457 = vld [vmem:[%s13 + $0xe8] sm:$0xff]
  %v1458 = vld [vmem:[%s13 + $0xf0] sm:$0xff]
  %v1459 = vld [vmem:[%s13 + $0xf8] sm:$0xff]
  %v1460 = vld [vmem:[%s14] sm:$0x3]
  %v1462 = vlaneseq
  %v1463 = vshrl.u32 %v1462, 7
  %v1464 = vsub.s32 0, %v1463
  %v1465 = vrot.slane %v1460, %v1464
  %v1466 = vlaneseq
  %v1467 = vshrl.u32 %v1466, 7
  %v1468 = vsub.s32 1, %v1467
  %v1469 = vrot.slane %v1460, %v1468
  %v1504 = vunpack.c.l.b16 %v1428
  %v1505 = vunpack.c.h.b16 %v1428
  %v1506 = vunpack.c.l.b16 %v1429
  %v1507 = vunpack.c.h.b16 %v1429
  %v1508 = vunpack.c.l.b16 %v1430
  %v1509 = vunpack.c.h.b16 %v1430
  %v1510 = vunpack.c.l.b16 %v1431
  %v1511 = vunpack.c.h.b16 %v1431
  %v1512 = vunpack.c.l.b16 %v1432
  %v1513 = vunpack.c.h.b16 %v1432
  %v1514 = vunpack.c.l.b16 %v1433
  %v1515 = vunpack.c.h.b16 %v1433
  %v1516 = vunpack.c.l.b16 %v1434
  %v1517 = vunpack.c.h.b16 %v1434
  %v1518 = vunpack.c.l.b16 %v1435
  %v1519 = vunpack.c.h.b16 %v1435
  %v1520 = vunpack.c.l.b16 %v1436
  %v1521 = vunpack.c.h.b16 %v1436
  %v1522 = vunpack.c.l.b16 %v1437
  %v1523 = vunpack.c.h.b16 %v1437
  %v1524 = vunpack.c.l.b16 %v1438
  %v1525 = vunpack.c.h.b16 %v1438
  %v1526 = vunpack.c.l.b16 %v1439
  %v1527 = vunpack.c.h.b16 %v1439
  %v1528 = vunpack.c.l.b16 %v1440
  %v1529 = vunpack.c.h.b16 %v1440
  %v1530 = vunpack.c.l.b16 %v1441
  %v1531 = vunpack.c.h.b16 %v1441
  %v1532 = vunpack.c.l.b16 %v1442
  %v1533 = vunpack.c.h.b16 %v1442
  %v1534 = vunpack.c.l.b16 %v1443
  %v1535 = vunpack.c.h.b16 %v1443
  %v1536 = vunpack.c.l.b16 %v1444
  %v1537 = vunpack.c.h.b16 %v1444
  %v1538 = vunpack.c.l.b16 %v1445
  %v1539 = vunpack.c.h.b16 %v1445
  %v1540 = vunpack.c.l.b16 %v1446
  %v1541 = vunpack.c.h.b16 %v1446
  %v1542 = vunpack.c.l.b16 %v1447
  %v1543 = vunpack.c.h.b16 %v1447
  %v1544 = vunpack.c.l.b16 %v1448
  %v1545 = vunpack.c.h.b16 %v1448
  %v1546 = vunpack.c.l.b16 %v1449
  %v1547 = vunpack.c.h.b16 %v1449
  %v1548 = vunpack.c.l.b16 %v1450
  %v1549 = vunpack.c.h.b16 %v1450
  %v1550 = vunpack.c.l.b16 %v1451
  %v1551 = vunpack.c.h.b16 %v1451
  %v1552 = vunpack.c.l.b16 %v1452
  %v1553 = vunpack.c.h.b16 %v1452
  %v1554 = vunpack.c.l.b16 %v1453
  %v1555 = vunpack.c.h.b16 %v1453
  %v1556 = vunpack.c.l.b16 %v1454
  %v1557 = vunpack.c.h.b16 %v1454
  %v1558 = vunpack.c.l.b16 %v1455
  %v1559 = vunpack.c.h.b16 %v1455
  %v1560 = vunpack.c.l.b16 %v1456
  %v1561 = vunpack.c.h.b16 %v1456
  %v1562 = vunpack.c.l.b16 %v1457
  %v1563 = vunpack.c.h.b16 %v1457
  %v1564 = vunpack.c.l.b16 %v1458
  %v1565 = vunpack.c.h.b16 %v1458
  %v1566 = vunpack.c.l.b16 %v1459
  %v1567 = vunpack.c.h.b16 %v1459
  %v1568 = vpack.c.b16 %v1506, %v1504
  %v1569 = vpack.c.b16 %v1507, %v1505
  %v1570 = vpack.c.b16 %v1510, %v1508
  %v1571 = vpack.c.b16 %v1511, %v1509
  %v1572 = vpack.c.b16 %v1514, %v1512
  %v1573 = vpack.c.b16 %v1515, %v1513
  %v1574 = vpack.c.b16 %v1518, %v1516
  %v1575 = vpack.c.b16 %v1519, %v1517
  %v1576 = vpack.c.b16 %v1522, %v1520
  %v1577 = vpack.c.b16 %v1523, %v1521
  %v1578 = vpack.c.b16 %v1526, %v1524
  %v1579 = vpack.c.b16 %v1527, %v1525
  %v1580 = vpack.c.b16 %v1530, %v1528
  %v1581 = vpack.c.b16 %v1531, %v1529
  %v1582 = vpack.c.b16 %v1534, %v1532
  %v1583 = vpack.c.b16 %v1535, %v1533
  %v1584 = vpack.c.b16 %v1538, %v1536
  %v1585 = vpack.c.b16 %v1539, %v1537
  %v1586 = vpack.c.b16 %v1542, %v1540
  %v1587 = vpack.c.b16 %v1543, %v1541
  %v1588 = vpack.c.b16 %v1546, %v1544
  %v1589 = vpack.c.b16 %v1547, %v1545
  %v1590 = vpack.c.b16 %v1550, %v1548
  %v1591 = vpack.c.b16 %v1551, %v1549
  %v1592 = vpack.c.b16 %v1554, %v1552
  %v1593 = vpack.c.b16 %v1555, %v1553
  %v1594 = vpack.c.b16 %v1558, %v1556
  %v1595 = vpack.c.b16 %v1559, %v1557
  %v1596 = vpack.c.b16 %v1562, %v1560
  %v1597 = vpack.c.b16 %v1563, %v1561
  %v1598 = vpack.c.b16 %v1566, %v1564
  %v1599 = vpack.c.b16 %v1567, %v1565
  %1632 = vmatprep.subr.bf16.mxu0 %v1569
  %1633 = vmatpush1.bf16.msra.mxu0 %v1568
  %1634 = vmatprep.subr.bf16.mxu0 %v1571
  %1635 = vmatpush1.bf16.msra.mxu0 %v1570
  %1636 = vmatprep.subr.bf16.mxu0 %v1573
  %1637 = vmatpush1.bf16.msra.mxu0 %v1572
  %1638 = vmatprep.subr.bf16.mxu0 %v1575
  %1639 = vmatpush1.bf16.msra.mxu0 %v1574
  %1640 = vmatprep.subr.bf16.mxu0 %v1577
  %1641 = vmatpush1.bf16.msra.mxu0 %v1576
  %1642 = vmatprep.subr.bf16.mxu0 %v1579
  %1643 = vmatpush1.bf16.msra.mxu0 %v1578
  %1644 = vmatprep.subr.bf16.mxu0 %v1581
  %1645 = vmatpush1.bf16.msra.mxu0 %v1580
  %1646 = vmatprep.subr.bf16.mxu0 %v1583
  %1647 = vmatpush1.bf16.msra.mxu0 %v1582
  %1648 = vmatprep.subr.bf16.mxu0 %v1585
  %1649 = vmatpush1.bf16.msra.mxu0 %v1584
  %1650 = vmatprep.subr.bf16.mxu0 %v1587
  %1651 = vmatpush1.bf16.msra.mxu0 %v1586
  %1652 = vmatprep.subr.bf16.mxu0 %v1589
  %1653 = vmatpush1.bf16.msra.mxu0 %v1588
  %1654 = vmatprep.subr.bf16.mxu0 %v1591
  %1655 = vmatpush1.bf16.msra.mxu0 %v1590
  %1656 = vmatprep.subr.bf16.mxu0 %v1593
  %1657 = vmatpush1.bf16.msra.mxu0 %v1592
  %1658 = vmatprep.subr.bf16.mxu0 %v1595
  %1659 = vmatpush1.bf16.msra.mxu0 %v1594
  %1660 = vmatprep.subr.bf16.mxu0 %v1597
  %1661 = vmatpush1.bf16.msra.mxu0 %v1596
  %1662 = vmatprep.subr.bf16.mxu0 %v1599
  %1663 = vmatpush1.bf16.msra.mxu0 %v1598
  %1664 = vmatprep.mubr.bf16.mxu0 %v1427
  %1665 = vmatmul.mubr.bf16.gmra.mrb[0].mxu0 %v1426
  %v1666 = vpop.f32.mrb[0].mxu0
  %v1667 = vadd.f32 %v1465, %v1666
  %v1668 = vpop.f32.mrb[0].mxu0
  %v1669 = vadd.f32 %v1469, %v1668
  %v1670 = vpop.f32.mrb[0].mxu0
  %v1671 = vpop.f32.mrb[0].mxu0
  %1672 = vdwg.mxu0
  %v1673 = vmax.f32 %v1667, 0.0
  %v1674 = vmax.f32 %v1669, 0.0
  %v1675 = vpack.c.bf16 %v1673, %v1673
  %v1676 = vpack.c.bf16 %v1674, %v1674
  %v1677 = vld [vmem:[%s15] sm:$0xf]
  %v1678 = vld [vmem:[%s15 + $0x4] sm:$0xf]
  %v1679 = vld [vmem:[%s15 + $0x8] sm:$0xf]
  %v1680 = vld [vmem:[%s15 + $0xc] sm:$0xf]
  %v1681 = vld [vmem:[%s15 + $0x10] sm:$0xf]
  %v1682 = vld [vmem:[%s15 + $0x14] sm:$0xf]
  %v1683 = vld [vmem:[%s15 + $0x18] sm:$0xf]
  %v1684 = vld [vmem:[%s15 + $0x1c] sm:$0xf]
  %v1685 = vld [vmem:[%s15 + $0x20] sm:$0xf]
  %v1686 = vld [vmem:[%s15 + $0x24] sm:$0xf]
  %v1687 = vld [vmem:[%s15 + $0x28] sm:$0xf]
  %v1688 = vld [vmem:[%s15 + $0x2c] sm:$0xf]
  %v1689 = vld [vmem:[%s15 + $0x30] sm:$0xf]
  %v1690 = vld [vmem:[%s15 + $0x34] sm:$0xf]
  %v1691 = vld [vmem:[%s15 + $0x38] sm:$0xf]
  %v1692 = vld [vmem:[%s15 + $0x3c] sm:$0xf]
  %v1693 = vld [vmem:[%s15 + $0x40] sm:$0xf]
  %v1694 = vld [vmem:[%s15 + $0x44] sm:$0xf]
  %v1695 = vld [vmem:[%s15 + $0x48] sm:$0xf]
  %v1696 = vld [vmem:[%s15 + $0x4c] sm:$0xf]
  %v1697 = vld [vmem:[%s15 + $0x50] sm:$0xf]
  %v1698 = vld [vmem:[%s15 + $0x54] sm:$0xf]
  %v1699 = vld [vmem:[%s15 + $0x58] sm:$0xf]
  %v1700 = vld [vmem:[%s15 + $0x5c] sm:$0xf]
  %v1701 = vld [vmem:[%s15 + $0x60] sm:$0xf]
  %v1702 = vld [vmem:[%s15 + $0x64] sm:$0xf]
  %v1703 = vld [vmem:[%s15 + $0x68] sm:$0xf]
  %v1704 = vld [vmem:[%s15 + $0x6c] sm:$0xf]
  %v1705 = vld [vmem:[%s15 + $0x70] sm:$0xf]
  %v1706 = vld [vmem:[%s15 + $0x74] sm:$0xf]
  %v1707 = vld [vmem:[%s15 + $0x78] sm:$0xf]
  %v1708 = vld [vmem:[%s15 + $0x7c] sm:$0xf]
  %v1709 = vld [vmem:[%s16] sm:$0x1]
  %v1711 = vlaneseq
  %v1712 = vshrl.u32 %v1711, 7
  %v1713 = vsub.s32 0, %v1712
  %v1714 = vrot.slane %v1709, %v1713
  %v1748 = vunpack.c.l.b16 %v1677
  %v1749 = vunpack.c.l.b16 %v1678
  %v1750 = vunpack.c.l.b16 %v1679
  %v1751 = vunpack.c.l.b16 %v1680
  %v1752 = vunpack.c.l.b16 %v1681
  %v1753 = vunpack.c.l.b16 %v1682
  %v1754 = vunpack.c.l.b16 %v1683
  %v1755 = vunpack.c.l.b16 %v1684
  %v1756 = vunpack.c.l.b16 %v1685
  %v1757 = vunpack.c.l.b16 %v1686
  %v1758 = vunpack.c.l.b16 %v1687
  %v1759 = vunpack.c.l.b16 %v1688
  %v1760 = vunpack.c.l.b16 %v1689
  %v1761 = vunpack.c.l.b16 %v1690
  %v1762 = vunpack.c.l.b16 %v1691
  %v1763 = vunpack.c.l.b16 %v1692
  %v1764 = vunpack.c.l.b16 %v1693
  %v1765 = vunpack.c.l.b16 %v1694
  %v1766 = vunpack.c.l.b16 %v1695
  %v1767 = vunpack.c.l.b16 %v1696
  %v1768 = vunpack.c.l.b16 %v1697
  %v1769 = vunpack.c.l.b16 %v1698
  %v1770 = vunpack.c.l.b16 %v1699
  %v1771 = vunpack.c.l.b16 %v1700
  %v1772 = vunpack.c.l.b16 %v1701
  %v1773 = vunpack.c.l.b16 %v1702
  %v1774 = vunpack.c.l.b16 %v1703
  %v1775 = vunpack.c.l.b16 %v1704
  %v1776 = vunpack.c.l.b16 %v1705
  %v1777 = vunpack.c.l.b16 %v1706
  %v1778 = vunpack.c.l.b16 %v1707
  %v1779 = vunpack.c.l.b16 %v1708
  %v1780 = vpack.c.b16 %v1749, %v1748
  %v1781 = vpack.c.b16 %v1751, %v1750
  %v1782 = vpack.c.b16 %v1753, %v1752
  %v1783 = vpack.c.b16 %v1755, %v1754
  %v1784 = vpack.c.b16 %v1757, %v1756
  %v1785 = vpack.c.b16 %v1759, %v1758
  %v1786 = vpack.c.b16 %v1761, %v1760
  %v1787 = vpack.c.b16 %v1763, %v1762
  %v1788 = vpack.c.b16 %v1765, %v1764
  %v1789 = vpack.c.b16 %v1767, %v1766
  %v1790 = vpack.c.b16 %v1769, %v1768
  %v1791 = vpack.c.b16 %v1771, %v1770
  %v1792 = vpack.c.b16 %v1773, %v1772
  %v1793 = vpack.c.b16 %v1775, %v1774
  %v1794 = vpack.c.b16 %v1777, %v1776
  %v1795 = vpack.c.b16 %v1779, %v1778
  %1812 = vmatprep.subr.bf16.mxu0 0
  %1813 = vmatpush1.bf16.msra.mxu0 %v1780
  %1814 = vmatprep.subr.bf16.mxu0 0
  %1815 = vmatpush1.bf16.msra.mxu0 %v1781
  %1816 = vmatprep.subr.bf16.mxu0 0
  %1817 = vmatpush1.bf16.msra.mxu0 %v1782
  %1818 = vmatprep.subr.bf16.mxu0 0
  %1819 = vmatpush1.bf16.msra.mxu0 %v1783
  %1820 = vmatprep.subr.bf16.mxu0 0
  %1821 = vmatpush1.bf16.msra.mxu0 %v1784
  %1822 = vmatprep.subr.bf16.mxu0 0
  %1823 = vmatpush1.bf16.msra.mxu0 %v1785
  %1824 = vmatprep.subr.bf16.mxu0 0
  %1825 = vmatpush1.bf16.msra.mxu0 %v1786
  %1826 = vmatprep.subr.bf16.mxu0 0
  %1827 = vmatpush1.bf16.msra.mxu0 %v1787
  %1828 = vmatprep.subr.bf16.mxu0 0
  %1829 = vmatpush1.bf16.msra.mxu0 %v1788
  %1830 = vmatprep.subr.bf16.mxu0 0
  %1831 = vmatpush1.bf16.msra.mxu0 %v1789
  %1832 = vmatprep.subr.bf16.mxu0 0
  %1833 = vmatpush1.bf16.msra.mxu0 %v1790
  %1834 = vmatprep.subr.bf16.mxu0 0
  %1835 = vmatpush1.bf16.msra.mxu0 %v1791
  %1836 = vmatprep.subr.bf16.mxu0 0
  %1837 = vmatpush1.bf16.msra.mxu0 %v1792
  %1838 = vmatprep.subr.bf16.mxu0 0
  %1839 = vmatpush1.bf16.msra.mxu0 %v1793
  %1840 = vmatprep.subr.bf16.mxu0 0
  %1841 = vmatpush1.bf16.msra.mxu0 %v1794
  %1842 = vmatprep.subr.bf16.mxu0 0
  %1843 = vmatpush1.bf16.msra.mxu0 %v1795
  %1844 = vmatprep.mubr.bf16.mxu0 %v1676
  %1845 = vmatmul.mubr.bf16.gmra.mrb[0].mxu0 %v1675
  %v1846 = vpop.f32.mrb[0].mxu0
  %v1847 = vadd.f32 %v1714, %v1846
  %v1848 = vpop.f32.mrb[0].mxu0
  %v1849 = vpop.f32.mrb[0].mxu0
  %v1850 = vpop.f32.mrb[0].mxu0
  %1851 = vdwg.mxu0
  %1852 = vst [vmem:[%s17] sm:$0xff] %v1847
  // Predicated region
  $region70: #{mlp_forward.1} parent=0 // pred_check
    _
  $region71: #{mlp_forward.1} parent=0 // pred_check_branch
    %1854 = sbr.rel (0) target = $region73
  $region72: #{mlp_forward.1} parent=0 // pred_region
    _
  $region73: #{mlp_forward.1} parent=0 // pred_fallthru
    _
  // Predicated region
  $region74: #{mlp_forward.1} parent=0 // pred_check
    _
  $region75: #{mlp_forward.1} parent=0 // pred_check_branch
    %1856 = sbr.rel (0) target = $region77
  $region76: #{mlp_forward.1} parent=0 // pred_region
    _
  $region77: #{mlp_forward.1} parent=0 // pred_fallthru
    _

</llo_original>
